<compile_context>
chip_gen: v5e
topology: v5e:2x2
jax: 0.10.0
libtpu: 0.0.40
codegen_flags: <defaults>
</compile_context>

<pallas_src>
import jax
import jax.numpy as jnp
import numpy as np
from jax.experimental import pallas as pl
from jax.experimental.pallas import tpu as pltpu

_LANE = 128


def _round_up(x, m):
    return (x + m - 1) // m * m


# ----------------------------------------------------------------------------
# Pallas kernels
# ----------------------------------------------------------------------------
def _conv_matmul_kernel(x_ref, w_ref, b_ref, o_ref):
    # y = relu(x @ w + b); x,w bf16 -> f32 accumulate, bias/relu in f32.
    y = jnp.dot(x_ref[...], w_ref[...], preferred_element_type=jnp.float32)
    y = jnp.maximum(y + b_ref[...], 0.0)
    o_ref[...] = y.astype(o_ref.dtype)


def _head_kernel(x_ref, w_ref, b_ref, lrep_ref, g_ref, bl_ref, o_ref):
    # Fused: Conv2d(48,96,4,2,1) + ReLU + Linear(384,1) + Sigmoid.
    # Rows of x are (n, h, w) with 4 rows (2x2 spatial) per sample.
    z = jnp.dot(x_ref[...], w_ref[...], preferred_element_type=jnp.float32)
    z = jnp.maximum(z + b_ref[...], 0.0)                 # (TM, 128)  conv+ReLU
    t = z * lrep_ref[...]                                # linear weight per (h,w) row
    # group-of-4 row sums via a 0/1 matmul (keeps the cross-row reduce on MXU)
    s = jnp.dot(g_ref[...], t, preferred_element_type=jnp.float32)  # (TM//4, 128)
    s = jnp.sum(s, axis=-1, keepdims=True) + bl_ref[...]             # (TM//4, 1)
    o_ref[...] = pl.reciprocal(1.0 + jnp.exp(-s), approx=True)       # sigmoid


# ----------------------------------------------------------------------------
# Layer wrappers (fixed TILE_M, parallel 1-D grid over rows)
# ----------------------------------------------------------------------------
def _conv_layer(patches, w_packed, b_packed, tile_cap=512):
    """relu(patches @ w + b); patches (M, K) bf16, K % 128 == 0."""
    M, K = patches.shape
    tile_m = min(tile_cap, _round_up(M, 32))
    Mp = _round_up(M, tile_m)
    if Mp != M:
        patches = jnp.pad(patches, ((0, Mp - M), (0, 0)))
    out = pl.pallas_call(
        _conv_matmul_kernel,
        out_shape=jax.ShapeDtypeStruct((Mp, _LANE), jnp.bfloat16),
        grid=(Mp // tile_m,),
        in_specs=[
            pl.BlockSpec((tile_m, K), lambda i: (i, 0)),
            pl.BlockSpec((K, _LANE), lambda i: (0, 0)),
            pl.BlockSpec((1, _LANE), lambda i: (0, 0)),
        ],
        out_specs=pl.BlockSpec((tile_m, _LANE), lambda i: (i, 0)),
        compiler_params=pltpu.CompilerParams(dimension_semantics=("parallel",)),
    )(patches, w_packed, b_packed)
    return out[:M]


def _head_layer(patches, w4, b4, lin_w_hwc, lin_b, tile_cap=512):
    """Fused cls_conv + Linear + Sigmoid.  patches (4*N, 768) bf16 -> (N, 1)."""
    M, K = patches.shape                         # M = 4 * N (rows grouped per sample)
    tile_m = min(tile_cap, _round_up(M, 32))     # multiple of 32 keeps 4-row groups aligned
    Mp = _round_up(M, tile_m)
    if Mp != M:
        patches = jnp.pad(patches, ((0, Mp - M), (0, 0)))
    lrep = jnp.tile(lin_w_hwc, (tile_m // 4, 1))                      # (tile_m, 128)
    g = (jnp.arange(tile_m)[None, :] // 4 ==
         jnp.arange(tile_m // 4)[:, None]).astype(jnp.float32)        # (tile_m//4, tile_m)
    bl = lin_b.reshape(1, 1).astype(jnp.float32)
    out = pl.pallas_call(
        _head_kernel,
        out_shape=jax.ShapeDtypeStruct((Mp // 4, 1), jnp.float32),
        grid=(Mp // tile_m,),
        in_specs=[
            pl.BlockSpec((tile_m, K), lambda i: (i, 0)),
            pl.BlockSpec((K, _LANE), lambda i: (0, 0)),
            pl.BlockSpec((1, _LANE), lambda i: (0, 0)),
            pl.BlockSpec((tile_m, _LANE), lambda i: (0, 0)),
            pl.BlockSpec((tile_m // 4, tile_m), lambda i: (0, 0)),
            pl.BlockSpec((1, 1), lambda i: (0, 0)),
        ],
        out_specs=pl.BlockSpec((tile_m // 4, 1), lambda i: (i, 0)),
        compiler_params=pltpu.CompilerParams(dimension_semantics=("parallel",)),
    )(patches, w4, b4, lrep, g, bl)
    return out[:M // 4]


# ----------------------------------------------------------------------------
# NHWC im2col (slice + concat only — no stack / no transpose)
# ----------------------------------------------------------------------------
def _extract_patches(x, k=4, stride=2, pad=1):
    """x: (N, H, W, C) -> (N*Ho*Wo, k*k*C) with (kh, kw, c) feature order."""
    N, H, W, C = x.shape
    Ho = (H + 2 * pad - k) // stride + 1
    Wo = (W + 2 * pad - k) // stride + 1
    xp = jnp.pad(x, ((0, 0), (pad, pad), (pad, pad), (0, 0)))
    cols = []
    for kh in range(k):
        for kw in range(k):
            cols.append(xp[:, kh:kh + stride * (Ho - 1) + 1:stride,
                           kw:kw + stride * (Wo - 1) + 1:stride, :])
    p = jnp.concatenate(cols, axis=-1)                    # (N, Ho, Wo, k*k*C)
    return p.reshape(N * Ho * Wo, k * k * C), Ho, Wo


# ----------------------------------------------------------------------------
# Parameter init (PyTorch-style) and one-time packing for the kernels
# ----------------------------------------------------------------------------
def _init_conv(key, out_c, in_c, k):
    fan_in = in_c * k * k
    bound = 1.0 / np.sqrt(fan_in)
    kw, kb = jax.random.split(key)
    w = jax.random.uniform(kw, (out_c, in_c, k, k), jnp.float32, -bound, bound)
    b = jax.random.uniform(kb, (out_c,), jnp.float32, -bound, bound)
    return w, b


def _init_linear(key, out_f, in_f):
    bound = 1.0 / np.sqrt(in_f)
    kw, kb = jax.random.split(key)
    w = jax.random.uniform(kw, (out_f, in_f), jnp.float32, -bound, bound)
    b = jax.random.uniform(kb, (out_f,), jnp.float32, -bound, bound)
    return w, b


def init_params(key):
    keys = jax.random.split(key, 5)
    return {
        "enc1": _init_conv(keys[0], 12, 3, 4),       # Conv2d(3, 12, 4, s=2, p=1)
        "enc2": _init_conv(keys[1], 24, 12, 4),      # Conv2d(12, 24, 4, s=2, p=1)
        "enc3": _init_conv(keys[2], 48, 24, 4),      # Conv2d(24, 48, 4, s=2, p=1)
        "cls_conv": _init_conv(keys[3], 96, 48, 4),  # Conv2d(48, 96, 4, s=2, p=1)
        "linear": _init_linear(keys[4], 1, 96 * 2 * 2),
    }


def _pack_conv(w, b, c_pad):
    """OIHW torch weight -> (k*k*c_pad, 128) bf16 matching (kh, kw, c) patches."""
    O, C, k, _ = w.shape
    wp = jnp.pad(w, ((0, _LANE - O), (0, c_pad - C), (0, 0), (0, 0)))
    w_mat = wp.transpose(2, 3, 1, 0).reshape(k * k * c_pad, _LANE).astype(jnp.bfloat16)
    b_row = jnp.pad(b, (0, _LANE - O)).reshape(1, _LANE).astype(jnp.float32)
    return w_mat, b_row


def pack_params(params):
    packed = {
        "enc1": _pack_conv(*params["enc1"], c_pad=8),        # K = 4*4*8  = 128
        "enc2": _pack_conv(*params["enc2"], c_pad=16),       # K = 4*4*16 = 256
        "enc3": _pack_conv(*params["enc3"], c_pad=24),       # K = 4*4*24 = 384
        "cls_conv": _pack_conv(*params["cls_conv"], c_pad=48),  # K = 768
    }
    wl, bl = params["linear"]                                # (1, 384), (1,)
    # nn.Linear consumes the NCHW flatten (c, h, w); re-order to (h*2+w, c)
    # rows so it can be applied to NHWC conv-output rows, pad c to 128 lanes.
    l_hwc = wl.reshape(96, 2, 2).transpose(1, 2, 0).reshape(4, 96)
    packed["linear"] = (jnp.pad(l_hwc, ((0, 0), (0, _LANE - 96))).astype(jnp.float32),
                        bl.astype(jnp.float32))
    return packed


# ----------------------------------------------------------------------------
# Full forward: CIFAR10AutoencoderCLS.forward
# ----------------------------------------------------------------------------
def cifar10_ae_cls_forward(packed, x_nchw):
    N = x_nchw.shape[0]
    # Single module-boundary layout change: NCHW -> NHWC, channels 3 -> 8, bf16.
    x = jnp.transpose(x_nchw, (0, 2, 3, 1)).astype(jnp.bfloat16)
    x = jnp.pad(x, ((0, 0), (0, 0), (0, 0), (0, 8 - x.shape[-1])))

    # encoder.get_embedding: three Conv(4, s=2, p=1) + ReLU layers.
    p, Ho, Wo = _extract_patches(x)                          # (N*256, 128)
    y = _conv_layer(p, *packed["enc1"])                      # 12 real channels (lane-dense)
    h = y.reshape(N, Ho, Wo, _LANE)[..., :16]                # keep 4 zero pad channels

    p, Ho, Wo = _extract_patches(h)                          # (N*64, 256)
    y = _conv_layer(p, *packed["enc2"])
    h = y.reshape(N, Ho, Wo, _LANE)[..., :24]

    p, Ho, Wo = _extract_patches(h)                          # (N*16, 384)
    y = _conv_layer(p, *packed["enc3"])
    h = y.reshape(N, Ho, Wo, _LANE)[..., :48]

    # Fused classifier head: cls_conv + ReLU + Linear(384,1) + Sigmoid.
    p, _, _ = _extract_patches(h)                            # (N*4, 768)
    lin_w, lin_b = packed["linear"]
    w4, b4 = packed["cls_conv"]
    return _head_layer(p, w4, b4, lin_w, lin_b)              # (N, 1) f32


# ----------------------------------------------------------------------------
# Pure-JAX f32 reference (lax.conv) for a sanity check.
# ----------------------------------------------------------------------------
def _ref_conv(x, w, b, stride, pad, relu):
    y = jax.lax.conv_general_dilated(
        x, w, (stride, stride), ((pad, pad), (pad, pad)),
        dimension_numbers=("NCHW", "OIHW", "NCHW"))
    y = y + b.reshape(1, -1, 1, 1)
    return jnp.maximum(y, 0.0) if relu else y


def reference_forward(params, x):
    h = _ref_conv(x, *params["enc1"], 2, 1, True)
    h = _ref_conv(h, *params["enc2"], 2, 1, True)
    h = _ref_conv(h, *params["enc3"], 2, 1, True)
    h = _ref_conv(h, *params["cls_conv"], 2, 1, True)
    h = h.reshape(h.shape[0], -1)
    w, b = params["linear"]
    return jax.nn.sigmoid(h @ w.T + b)


if __name__ == "__main__":
    key = jax.random.PRNGKey(0)
    k_param, k_x = jax.random.split(key)
    params = init_params(k_param)
    packed = pack_params(params)

    # CIFAR10-shaped input (the classifier head requires 32x32 spatial).
    x = jax.random.normal(k_x, (2, 3, 32, 32), jnp.float32)

    fwd = jax.jit(cifar10_ae_cls_forward)
    out = jax.block_until_ready(fwd(packed, x))
    assert out.shape == (2, 1), out.shape

    ref = jax.block_until_ready(reference_forward(params, x))
    np.testing.assert_allclose(np.asarray(out), np.asarray(ref), atol=5e-2, rtol=5e-2)

    print("KERNEL_OK")
</pallas_src>

<mosaic_0001>
module attributes {stable_mosaic.version = 11 : i64} {
  func.func @_conv_matmul_kernel(%arg0: i32, %arg1: memref<512x128xbf16, #tpu.memory_space<vmem>>, %arg2: memref<128x128xbf16, #tpu.memory_space<vmem>>, %arg3: memref<1x128xf32, #tpu.memory_space<vmem>>, %arg4: memref<512x128xbf16, #tpu.memory_space<vmem>>) attributes {dimension_semantics = [#tpu.dimension_semantics<parallel>], iteration_bounds = array<i64: 1>, scalar_prefetch = 0 : i64, scratch_operands = 0 : i64, tpu.core_type = #tpu.core_type<tc>, window_params = [{transform_indices = @transform_0, window_bounds = array<i64: 512, 128>}, {pipeline_mode = #tpu.pipeline_mode<synchronous>, transform_indices = @transform_1, window_bounds = array<i64: 128, 128>}, {pipeline_mode = #tpu.pipeline_mode<synchronous>, transform_indices = @transform_2, window_bounds = array<i64: 1, 128>}, {transform_indices = @transform_3, window_bounds = array<i64: 512, 128>}]} {
    %c0 = arith.constant 0 : index
    %c0_0 = arith.constant 0 : index
    %0 = vector.load %arg1[%c0, %c0_0] : memref<512x128xbf16, #tpu.memory_space<vmem>>, vector<512x128xbf16>
    %c0_1 = arith.constant 0 : index
    %c0_2 = arith.constant 0 : index
    %1 = vector.load %arg2[%c0_1, %c0_2] : memref<128x128xbf16, #tpu.memory_space<vmem>>, vector<128x128xbf16>
    %cst = arith.constant dense<0.000000e+00> : vector<512x128xf32>
    %2 = tpu.matmul %0, %1, %cst {dimension_numbers = #tpu.dot_dimension_numbers<[1], [0], [0], [1], [0, 0, 1, 1], [], []>} : vector<512x128xbf16>, vector<128x128xbf16>, vector<512x128xf32> -> vector<512x128xf32>
    %c0_3 = arith.constant 0 : index
    %c0_4 = arith.constant 0 : index
    %3 = vector.load %arg3[%c0_3, %c0_4] : memref<1x128xf32, #tpu.memory_space<vmem>>, vector<1x128xf32>
    %4 = vector.broadcast %3 : vector<1x128xf32> to vector<512x128xf32>
    %5 = arith.addf %2, %4 : vector<512x128xf32>
    %cst_5 = arith.constant 0.000000e+00 : f32
    %6 = vector.broadcast %cst_5 : f32 to vector<512x128xf32>
    %7 = arith.maximumf %5, %6 : vector<512x128xf32>
    %8 = arith.truncf %7 : vector<512x128xf32> to vector<512x128xbf16>
    %c0_6 = arith.constant 0 : index
    %c0_7 = arith.constant 0 : index
    %9 = vector.load %arg4[%c0_6, %c0_7] : memref<512x128xbf16, #tpu.memory_space<vmem>>, vector<512x128xbf16>
    tpu.vector_store %arg4[%c0_6, %c0_7], %8 {strides = array<i32>} : memref<512x128xbf16, #tpu.memory_space<vmem>>, vector<512x128xbf16>,
    return
  }
  func.func @transform_0(%arg0: i32) -> (i32, i32) {
    %c0_i32 = arith.constant 0 : i32
    %c0_i32_0 = arith.constant 0 : i32
    return %arg0, %c0_i32 : i32, i32
  }
  func.func @transform_1(%arg0: i32) -> (i32, i32) {
    %c0_i32 = arith.constant 0 : i32
    %c0_i32_0 = arith.constant 0 : i32
    %c0_i32_1 = arith.constant 0 : i32
    return %c0_i32, %c0_i32_0 : i32, i32
  }
  func.func @transform_2(%arg0: i32) -> (i32, i32) {
    %c0_i32 = arith.constant 0 : i32
    %c0_i32_0 = arith.constant 0 : i32
    %c0_i32_1 = arith.constant 0 : i32
    return %c0_i32, %c0_i32_0 : i32, i32
  }
  func.func @transform_3(%arg0: i32) -> (i32, i32) {
    %c0_i32 = arith.constant 0 : i32
    %c0_i32_0 = arith.constant 0 : i32
    return %arg0, %c0_i32 : i32, i32
  }
}

module attributes {stable_mosaic.version = 11 : i64} {
  func.func @_conv_matmul_kernel(%arg0: i32, %arg1: memref<128x256xbf16, #tpu.memory_space<vmem>>, %arg2: memref<256x128xbf16, #tpu.memory_space<vmem>>, %arg3: memref<1x128xf32, #tpu.memory_space<vmem>>, %arg4: memref<128x128xbf16, #tpu.memory_space<vmem>>) attributes {dimension_semantics = [#tpu.dimension_semantics<parallel>], iteration_bounds = array<i64: 1>, scalar_prefetch = 0 : i64, scratch_operands = 0 : i64, tpu.core_type = #tpu.core_type<tc>, window_params = [{transform_indices = @transform_0, window_bounds = array<i64: 128, 256>}, {pipeline_mode = #tpu.pipeline_mode<synchronous>, transform_indices = @transform_1, window_bounds = array<i64: 256, 128>}, {pipeline_mode = #tpu.pipeline_mode<synchronous>, transform_indices = @transform_2, window_bounds = array<i64: 1, 128>}, {transform_indices = @transform_3, window_bounds = array<i64: 128, 128>}]} {
    %c0 = arith.constant 0 : index
    %c0_0 = arith.constant 0 : index
    %0 = vector.load %arg1[%c0, %c0_0] : memref<128x256xbf16, #tpu.memory_space<vmem>>, vector<128x256xbf16>
    %c0_1 = arith.constant 0 : index
    %c0_2 = arith.constant 0 : index
    %1 = vector.load %arg2[%c0_1, %c0_2] : memref<256x128xbf16, #tpu.memory_space<vmem>>, vector<256x128xbf16>
    %cst = arith.constant dense<0.000000e+00> : vector<128x128xf32>
    %2 = tpu.matmul %0, %1, %cst {dimension_numbers = #tpu.dot_dimension_numbers<[1], [0], [0], [1], [0, 0, 1, 1], [], []>} : vector<128x256xbf16>, vector<256x128xbf16>, vector<128x128xf32> -> vector<128x128xf32>
    %c0_3 = arith.constant 0 : index
    %c0_4 = arith.constant 0 : index
    %3 = vector.load %arg3[%c0_3, %c0_4] : memref<1x128xf32, #tpu.memory_space<vmem>>, vector<1x128xf32>
    %4 = vector.broadcast %3 : vector<1x128xf32> to vector<128x128xf32>
    %5 = arith.addf %2, %4 : vector<128x128xf32>
    %cst_5 = arith.constant 0.000000e+00 : f32
    %6 = vector.broadcast %cst_5 : f32 to vector<128x128xf32>
    %7 = arith.maximumf %5, %6 : vector<128x128xf32>
    %8 = arith.truncf %7 : vector<128x128xf32> to vector<128x128xbf16>
    %c0_6 = arith.constant 0 : index
    %c0_7 = arith.constant 0 : index
    %9 = vector.load %arg4[%c0_6, %c0_7] : memref<128x128xbf16, #tpu.memory_space<vmem>>, vector<128x128xbf16>
    tpu.vector_store %arg4[%c0_6, %c0_7], %8 {strides = array<i32>} : memref<128x128xbf16, #tpu.memory_space<vmem>>, vector<128x128xbf16>,
    return
  }
  func.func @transform_0(%arg0: i32) -> (i32, i32) {
    %c0_i32 = arith.constant 0 : i32
    %c0_i32_0 = arith.constant 0 : i32
    return %arg0, %c0_i32 : i32, i32
  }
  func.func @transform_1(%arg0: i32) -> (i32, i32) {
    %c0_i32 = arith.constant 0 : i32
    %c0_i32_0 = arith.constant 0 : i32
    %c0_i32_1 = arith.constant 0 : i32
    return %c0_i32, %c0_i32_0 : i32, i32
  }
  func.func @transform_2(%arg0: i32) -> (i32, i32) {
    %c0_i32 = arith.constant 0 : i32
    %c0_i32_0 = arith.constant 0 : i32
    %c0_i32_1 = arith.constant 0 : i32
    return %c0_i32, %c0_i32_0 : i32, i32
  }
  func.func @transform_3(%arg0: i32) -> (i32, i32) {
    %c0_i32 = arith.constant 0 : i32
    %c0_i32_0 = arith.constant 0 : i32
    return %arg0, %c0_i32 : i32, i32
  }
}

module attributes {stable_mosaic.version = 11 : i64} {
  func.func @_conv_matmul_kernel(%arg0: i32, %arg1: memref<32x384xbf16, #tpu.memory_space<vmem>>, %arg2: memref<384x128xbf16, #tpu.memory_space<vmem>>, %arg3: memref<1x128xf32, #tpu.memory_space<vmem>>, %arg4: memref<32x128xbf16, #tpu.memory_space<vmem>>) attributes {dimension_semantics = [#tpu.dimension_semantics<parallel>], iteration_bounds = array<i64: 1>, scalar_prefetch = 0 : i64, scratch_operands = 0 : i64, tpu.core_type = #tpu.core_type<tc>, window_params = [{transform_indices = @transform_0, window_bounds = array<i64: 32, 384>}, {pipeline_mode = #tpu.pipeline_mode<synchronous>, transform_indices = @transform_1, window_bounds = array<i64: 384, 128>}, {pipeline_mode = #tpu.pipeline_mode<synchronous>, transform_indices = @transform_2, window_bounds = array<i64: 1, 128>}, {transform_indices = @transform_3, window_bounds = array<i64: 32, 128>}]} {
    %c0 = arith.constant 0 : index
    %c0_0 = arith.constant 0 : index
    %0 = vector.load %arg1[%c0, %c0_0] : memref<32x384xbf16, #tpu.memory_space<vmem>>, vector<32x384xbf16>
    %c0_1 = arith.constant 0 : index
    %c0_2 = arith.constant 0 : index
    %1 = vector.load %arg2[%c0_1, %c0_2] : memref<384x128xbf16, #tpu.memory_space<vmem>>, vector<384x128xbf16>
    %cst = arith.constant dense<0.000000e+00> : vector<32x128xf32>
    %2 = tpu.matmul %0, %1, %cst {dimension_numbers = #tpu.dot_dimension_numbers<[1], [0], [0], [1], [0, 0, 1, 1], [], []>} : vector<32x384xbf16>, vector<384x128xbf16>, vector<32x128xf32> -> vector<32x128xf32>
    %c0_3 = arith.constant 0 : index
    %c0_4 = arith.constant 0 : index
    %3 = vector.load %arg3[%c0_3, %c0_4] : memref<1x128xf32, #tpu.memory_space<vmem>>, vector<1x128xf32>
    %4 = vector.broadcast %3 : vector<1x128xf32> to vector<32x128xf32>
    %5 = arith.addf %2, %4 : vector<32x128xf32>
    %cst_5 = arith.constant 0.000000e+00 : f32
    %6 = vector.broadcast %cst_5 : f32 to vector<32x128xf32>
    %7 = arith.maximumf %5, %6 : vector<32x128xf32>
    %8 = arith.truncf %7 : vector<32x128xf32> to vector<32x128xbf16>
    %c0_6 = arith.constant 0 : index
    %c0_7 = arith.constant 0 : index
    %9 = vector.load %arg4[%c0_6, %c0_7] : memref<32x128xbf16, #tpu.memory_space<vmem>>, vector<32x128xbf16>
    tpu.vector_store %arg4[%c0_6, %c0_7], %8 {strides = array<i32>} : memref<32x128xbf16, #tpu.memory_space<vmem>>, vector<32x128xbf16>,
    return
  }
  func.func @transform_0(%arg0: i32) -> (i32, i32) {
    %c0_i32 = arith.constant 0 : i32
    %c0_i32_0 = arith.constant 0 : i32
    return %arg0, %c0_i32 : i32, i32
  }
  func.func @transform_1(%arg0: i32) -> (i32, i32) {
    %c0_i32 = arith.constant 0 : i32
    %c0_i32_0 = arith.constant 0 : i32
    %c0_i32_1 = arith.constant 0 : i32
    return %c0_i32, %c0_i32_0 : i32, i32
  }
  func.func @transform_2(%arg0: i32) -> (i32, i32) {
    %c0_i32 = arith.constant 0 : i32
    %c0_i32_0 = arith.constant 0 : i32
    %c0_i32_1 = arith.constant 0 : i32
    return %c0_i32, %c0_i32_0 : i32, i32
  }
  func.func @transform_3(%arg0: i32) -> (i32, i32) {
    %c0_i32 = arith.constant 0 : i32
    %c0_i32_0 = arith.constant 0 : i32
    return %arg0, %c0_i32 : i32, i32
  }
}

module attributes {stable_mosaic.version = 11 : i64} {
  func.func @_head_kernel(%arg0: i32, %arg1: memref<32x768xbf16, #tpu.memory_space<vmem>>, %arg2: memref<768x128xbf16, #tpu.memory_space<vmem>>, %arg3: memref<1x128xf32, #tpu.memory_space<vmem>>, %arg4: memref<32x128xf32, #tpu.memory_space<vmem>>, %arg5: memref<8x32xf32, #tpu.memory_space<vmem>>, %arg6: memref<1x1xf32, #tpu.memory_space<vmem>>, %arg7: memref<8x1xf32, #tpu.memory_space<vmem>>) attributes {dimension_semantics = [#tpu.dimension_semantics<parallel>], iteration_bounds = array<i64: 1>, scalar_prefetch = 0 : i64, scratch_operands = 0 : i64, tpu.core_type = #tpu.core_type<tc>, window_params = [{transform_indices = @transform_0, window_bounds = array<i64: 32, 768>}, {pipeline_mode = #tpu.pipeline_mode<synchronous>, transform_indices = @transform_1, window_bounds = array<i64: 768, 128>}, {pipeline_mode = #tpu.pipeline_mode<synchronous>, transform_indices = @transform_2, window_bounds = array<i64: 1, 128>}, {pipeline_mode = #tpu.pipeline_mode<synchronous>, transform_indices = @transform_3, window_bounds = array<i64: 32, 128>}, {pipeline_mode = #tpu.pipeline_mode<synchronous>, transform_indices = @transform_4, window_bounds = array<i64: 8, 32>}, {pipeline_mode = #tpu.pipeline_mode<synchronous>, transform_indices = @transform_5, window_bounds = array<i64: 1, 1>}, {transform_indices = @transform_6, window_bounds = array<i64: 8, 1>}]} {
    %c0 = arith.constant 0 : index
    %c0_0 = arith.constant 0 : index
    %0 = vector.load %arg1[%c0, %c0_0] : memref<32x768xbf16, #tpu.memory_space<vmem>>, vector<32x768xbf16>
    %c0_1 = arith.constant 0 : index
    %c0_2 = arith.constant 0 : index
    %1 = vector.load %arg2[%c0_1, %c0_2] : memref<768x128xbf16, #tpu.memory_space<vmem>>, vector<768x128xbf16>
    %cst = arith.constant dense<0.000000e+00> : vector<32x128xf32>
    %2 = tpu.matmul %0, %1, %cst {dimension_numbers = #tpu.dot_dimension_numbers<[1], [0], [0], [1], [0, 0, 1, 1], [], []>} : vector<32x768xbf16>, vector<768x128xbf16>, vector<32x128xf32> -> vector<32x128xf32>
    %c0_3 = arith.constant 0 : index
    %c0_4 = arith.constant 0 : index
    %3 = vector.load %arg3[%c0_3, %c0_4] : memref<1x128xf32, #tpu.memory_space<vmem>>, vector<1x128xf32>
    %4 = vector.broadcast %3 : vector<1x128xf32> to vector<32x128xf32>
    %5 = arith.addf %2, %4 : vector<32x128xf32>
    %cst_5 = arith.constant 0.000000e+00 : f32
    %6 = vector.broadcast %cst_5 : f32 to vector<32x128xf32>
    %7 = arith.maximumf %5, %6 : vector<32x128xf32>
    %c0_6 = arith.constant 0 : index
    %c0_7 = arith.constant 0 : index
    %8 = vector.load %arg4[%c0_6, %c0_7] : memref<32x128xf32, #tpu.memory_space<vmem>>, vector<32x128xf32>
    %9 = arith.mulf %7, %8 : vector<32x128xf32>
    %c0_8 = arith.constant 0 : index
    %c0_9 = arith.constant 0 : index
    %10 = vector.load %arg5[%c0_8, %c0_9] : memref<8x32xf32, #tpu.memory_space<vmem>>, vector<8x32xf32>
    %cst_10 = arith.constant dense<0.000000e+00> : vector<8x128xf32>
    %11 = tpu.matmul %10, %9, %cst_10 {dimension_numbers = #tpu.dot_dimension_numbers<[1], [0], [0], [1], [0, 0, 1, 1], [], []>} : vector<8x32xf32>, vector<32x128xf32>, vector<8x128xf32> -> vector<8x128xf32>
    %cst_11 = arith.constant dense<0.000000e+00> : vector<8xf32>
    %12 = vector.multi_reduction <add>, %11, %cst_11 [1] : vector<8x128xf32> to vector<8xf32>
    %13 = vector.shape_cast %12 : vector<8xf32> to vector<8x1xf32>
    %c0_12 = arith.constant 0 : index
    %c0_13 = arith.constant 0 : index
    %14 = vector.load %arg6[%c0_12, %c0_13] : memref<1x1xf32, #tpu.memory_space<vmem>>, vector<1x1xf32>
    %15 = vector.broadcast %14 : vector<1x1xf32> to vector<8x1xf32>
    %16 = arith.addf %13, %15 : vector<8x1xf32>
    %cst_14 = arith.constant 0.000000e+00 : f32
    %17 = vector.broadcast %cst_14 : f32 to vector<8x1xf32>
    %18 = arith.subf %17, %16 : vector<8x1xf32>
    %19 = math.exp %18 : vector<8x1xf32>
    %cst_15 = arith.constant 1.000000e+00 : f32
    %20 = vector.broadcast %cst_15 : f32 to vector<8x1xf32>
    %21 = arith.addf %20, %19 : vector<8x1xf32>
    %22 = tpu.reciprocal %21 {approx = true} : vector<8x1xf32> -> vector<8x1xf32>
    %c0_16 = arith.constant 0 : index
    %c0_17 = arith.constant 0 : index
    %23 = vector.load %arg7[%c0_16, %c0_17] : memref<8x1xf32, #tpu.memory_space<vmem>>, vector<8x1xf32>
    tpu.vector_store %arg7[%c0_16, %c0_17], %22 {strides = array<i32>} : memref<8x1xf32, #tpu.memory_space<vmem>>, vector<8x1xf32>,
    return
  }
  func.func @transform_0(%arg0: i32) -> (i32, i32) {
    %c0_i32 = arith.constant 0 : i32
    %c0_i32_0 = arith.constant 0 : i32
    return %arg0, %c0_i32 : i32, i32
  }
  func.func @transform_1(%arg0: i32) -> (i32, i32) {
    %c0_i32 = arith.constant 0 : i32
    %c0_i32_0 = arith.constant 0 : i32
    %c0_i32_1 = arith.constant 0 : i32
    return %c0_i32, %c0_i32_0 : i32, i32
  }
  func.func @transform_2(%arg0: i32) -> (i32, i32) {
    %c0_i32 = arith.constant 0 : i32
    %c0_i32_0 = arith.constant 0 : i32
    %c0_i32_1 = arith.constant 0 : i32
    return %c0_i32, %c0_i32_0 : i32, i32
  }
  func.func @transform_3(%arg0: i32) -> (i32, i32) {
    %c0_i32 = arith.constant 0 : i32
    %c0_i32_0 = arith.constant 0 : i32
    %c0_i32_1 = arith.constant 0 : i32
    return %c0_i32, %c0_i32_0 : i32, i32
  }
  func.func @transform_4(%arg0: i32) -> (i32, i32) {
    %c0_i32 = arith.constant 0 : i32
    %c0_i32_0 = arith.constant 0 : i32
    %c0_i32_1 = arith.constant 0 : i32
    return %c0_i32, %c0_i32_0 : i32, i32
  }
  func.func @transform_5(%arg0: i32) -> (i32, i32) {
    %c0_i32 = arith.constant 0 : i32
    %c0_i32_0 = arith.constant 0 : i32
    %c0_i32_1 = arith.constant 0 : i32
    return %c0_i32, %c0_i32_0 : i32, i32
  }
  func.func @transform_6(%arg0: i32) -> (i32, i32) {
    %c0_i32 = arith.constant 0 : i32
    %c0_i32_0 = arith.constant 0 : i32
    return %arg0, %c0_i32 : i32, i32
  }
}

</mosaic_0001>

<llo_original>
// kernel: cifar10_ae_cls_forward.4
$region0: #{cifar10_ae_cls_forward.4}
  #allocation0 [shape = 'u32[]', space=smem, size = 0x4, offset = 0x4, fixed_abs, tag = 'smem constant byte address 0x4 - core index']
  #allocation1 [shape = 'u32[72,128]{1,0:T(1,128)}', space=vmem, size = 0x9000, scoped, tag = 'internal scratch']
  %s0 = inlined_call_operand.vmem [shape: bf16[512,128], index: 0, kind: input, shape index: {}]
  %s1 = inlined_call_operand.vmem [shape: bf16[128,128], index: 1, kind: input, shape index: {}]
  %s2 = inlined_call_operand.vmem [shape: f32[1,128], index: 2, kind: input, shape index: {}]
  %s3 = inlined_call_operand.vmem [shape: bf16[512,128], index: 3, kind: output, shape index: {}]
  %s4 = sld [smem:[#allocation0]]
  $region22: #{cifar10_ae_cls_forward.4} parent=0
    _
  %s6 = ssub.s32 1, %s4
  %s7 = scalar_select 0, %s6, %s4
  // Predicated region
  $region2: #{cifar10_ae_cls_forward.4} parent=0 // pred_check
    _
  $region3: #{cifar10_ae_cls_forward.4} parent=0 // pred_check_branch
    %9 = sbr.rel (0) target = $region5
  $region4: #{cifar10_ae_cls_forward.4} parent=0 // pred_region
    _
  $region5: #{cifar10_ae_cls_forward.4} parent=0 // pred_fallthru
    _
  // Predicated region
  $region6: #{cifar10_ae_cls_forward.4} parent=0 // pred_check
    _
  $region7: #{cifar10_ae_cls_forward.4} parent=0 // pred_check_branch
    %11 = sbr.rel (0) target = $region9
  $region8: #{cifar10_ae_cls_forward.4} parent=0 // pred_region
    _
  $region9: #{cifar10_ae_cls_forward.4} parent=0 // pred_fallthru
    _
  // Predicated region
  $region10: #{cifar10_ae_cls_forward.4} parent=0 // pred_check
    _
  $region11: #{cifar10_ae_cls_forward.4} parent=0 // pred_check_branch
    %13 = sbr.rel (0) target = $region13
  $region12: #{cifar10_ae_cls_forward.4} parent=0 // pred_region
    _
  $region13: #{cifar10_ae_cls_forward.4} parent=0 // pred_fallthru
    _
  %v14 = vld [vmem:[%s0] sm:$0xf]
  %v15 = vld [vmem:[%s0 + $0x4] sm:$0xf]
  %v16 = vld [vmem:[%s0 + $0x8] sm:$0xf]
  %v17 = vld [vmem:[%s0 + $0xc] sm:$0xf]
  %v18 = vld [vmem:[%s0 + $0x10] sm:$0xf]
  %v19 = vld [vmem:[%s0 + $0x14] sm:$0xf]
  %v20 = vld [vmem:[%s0 + $0x18] sm:$0xf]
  %v21 = vld [vmem:[%s0 + $0x1c] sm:$0xf]
  %v22 = vld [vmem:[%s0 + $0x20] sm:$0xf]
  %v23 = vld [vmem:[%s0 + $0x24] sm:$0xf]
  %v24 = vld [vmem:[%s0 + $0x28] sm:$0xf]
  %v25 = vld [vmem:[%s0 + $0x2c] sm:$0xf]
  %v26 = vld [vmem:[%s0 + $0x30] sm:$0xf]
  %v27 = vld [vmem:[%s0 + $0x34] sm:$0xf]
  %v28 = vld [vmem:[%s0 + $0x38] sm:$0xf]
  %v29 = vld [vmem:[%s0 + $0x3c] sm:$0xf]
  %v30 = vld [vmem:[%s0 + $0x40] sm:$0xf]
  %v31 = vld [vmem:[%s0 + $0x44] sm:$0xf]
  %v32 = vld [vmem:[%s0 + $0x48] sm:$0xf]
  %v33 = vld [vmem:[%s0 + $0x4c] sm:$0xf]
  %v34 = vld [vmem:[%s0 + $0x50] sm:$0xf]
  %v35 = vld [vmem:[%s0 + $0x54] sm:$0xf]
  %v36 = vld [vmem:[%s0 + $0x58] sm:$0xf]
  %v37 = vld [vmem:[%s0 + $0x5c] sm:$0xf]
  %v38 = vld [vmem:[%s0 + $0x60] sm:$0xf]
  %v39 = vld [vmem:[%s0 + $0x64] sm:$0xf]
  %v40 = vld [vmem:[%s0 + $0x68] sm:$0xf]
  %v41 = vld [vmem:[%s0 + $0x6c] sm:$0xf]
  %v42 = vld [vmem:[%s0 + $0x70] sm:$0xf]
  %v43 = vld [vmem:[%s0 + $0x74] sm:$0xf]
  %v44 = vld [vmem:[%s0 + $0x78] sm:$0xf]
  %v45 = vld [vmem:[%s0 + $0x7c] sm:$0xf]
  %v46 = vld [vmem:[%s0 + $0x80] sm:$0xf]
  %v47 = vld [vmem:[%s0 + $0x84] sm:$0xf]
  %v48 = vld [vmem:[%s0 + $0x88] sm:$0xf]
  %v49 = vld [vmem:[%s0 + $0x8c] sm:$0xf]
  %v50 = vld [vmem:[%s0 + $0x90] sm:$0xf]
  %v51 = vld [vmem:[%s0 + $0x94] sm:$0xf]
  %v52 = vld [vmem:[%s0 + $0x98] sm:$0xf]
  %v53 = vld [vmem:[%s0 + $0x9c] sm:$0xf]
  %v54 = vld [vmem:[%s0 + $0xa0] sm:$0xf]
  %v55 = vld [vmem:[%s0 + $0xa4] sm:$0xf]
  %v56 = vld [vmem:[%s0 + $0xa8] sm:$0xf]
  %v57 = vld [vmem:[%s0 + $0xac] sm:$0xf]
  %v58 = vld [vmem:[%s0 + $0xb0] sm:$0xf]
  %v59 = vld [vmem:[%s0 + $0xb4] sm:$0xf]
  %v60 = vld [vmem:[%s0 + $0xb8] sm:$0xf]
  %v61 = vld [vmem:[%s0 + $0xbc] sm:$0xf]
  %v62 = vld [vmem:[%s0 + $0xc0] sm:$0xf]
  %v63 = vld [vmem:[%s0 + $0xc4] sm:$0xf]
  %v64 = vld [vmem:[%s0 + $0xc8] sm:$0xf]
  %v65 = vld [vmem:[%s0 + $0xcc] sm:$0xf]
  %v66 = vld [vmem:[%s0 + $0xd0] sm:$0xf]
  %v67 = vld [vmem:[%s0 + $0xd4] sm:$0xf]
  %v68 = vld [vmem:[%s0 + $0xd8] sm:$0xf]
  %v69 = vld [vmem:[%s0 + $0xdc] sm:$0xf]
  %v70 = vld [vmem:[%s0 + $0xe0] sm:$0xf]
  %v71 = vld [vmem:[%s0 + $0xe4] sm:$0xf]
  %v72 = vld [vmem:[%s0 + $0xe8] sm:$0xf]
  %v73 = vld [vmem:[%s0 + $0xec] sm:$0xf]
  %v74 = vld [vmem:[%s0 + $0xf0] sm:$0xf]
  %v75 = vld [vmem:[%s0 + $0xf4] sm:$0xf]
  %v76 = vld [vmem:[%s0 + $0xf8] sm:$0xf]
  %v77 = vld [vmem:[%s0 + $0xfc] sm:$0xf]
  %v78 = vld [vmem:[%s1] sm:$0xf]
  %v79 = vld [vmem:[%s1 + $0x4] sm:$0xf]
  %v80 = vld [vmem:[%s1 + $0x8] sm:$0xf]
  %v81 = vld [vmem:[%s1 + $0xc] sm:$0xf]
  %v82 = vld [vmem:[%s1 + $0x10] sm:$0xf]
  %v83 = vld [vmem:[%s1 + $0x14] sm:$0xf]
  %v84 = vld [vmem:[%s1 + $0x18] sm:$0xf]
  %v85 = vld [vmem:[%s1 + $0x1c] sm:$0xf]
  %v86 = vld [vmem:[%s1 + $0x20] sm:$0xf]
  %v87 = vld [vmem:[%s1 + $0x24] sm:$0xf]
  %v88 = vld [vmem:[%s1 + $0x28] sm:$0xf]
  %v89 = vld [vmem:[%s1 + $0x2c] sm:$0xf]
  %v90 = vld [vmem:[%s1 + $0x30] sm:$0xf]
  %v91 = vld [vmem:[%s1 + $0x34] sm:$0xf]
  %v92 = vld [vmem:[%s1 + $0x38] sm:$0xf]
  %v93 = vld [vmem:[%s1 + $0x3c] sm:$0xf]
  %v94 = vld [vmem:[%s2] sm:$0x1]
  %v96 = vperm.slane %v94, 0
  %v162 = vunpack.c.l.b16 %v14
  %v163 = vunpack.c.l.b16 %v15
  %v164 = vunpack.c.l.b16 %v16
  %v165 = vunpack.c.l.b16 %v17
  %v166 = vunpack.c.l.b16 %v18
  %v167 = vunpack.c.l.b16 %v19
  %v168 = vunpack.c.l.b16 %v20
  %v169 = vunpack.c.l.b16 %v21
  %v170 = vunpack.c.l.b16 %v22
  %v171 = vunpack.c.l.b16 %v23
  %v172 = vunpack.c.l.b16 %v24
  %v173 = vunpack.c.l.b16 %v25
  %v174 = vunpack.c.l.b16 %v26
  %v175 = vunpack.c.l.b16 %v27
  %v176 = vunpack.c.l.b16 %v28
  %v177 = vunpack.c.l.b16 %v29
  %v178 = vunpack.c.l.b16 %v30
  %v179 = vunpack.c.l.b16 %v31
  %v180 = vunpack.c.l.b16 %v32
  %v181 = vunpack.c.l.b16 %v33
  %v182 = vunpack.c.l.b16 %v34
  %v183 = vunpack.c.l.b16 %v35
  %v184 = vunpack.c.l.b16 %v36
  %v185 = vunpack.c.l.b16 %v37
  %v186 = vunpack.c.l.b16 %v38
  %v187 = vunpack.c.l.b16 %v39
  %v188 = vunpack.c.l.b16 %v40
  %v189 = vunpack.c.l.b16 %v41
  %v190 = vunpack.c.l.b16 %v42
  %v191 = vunpack.c.l.b16 %v43
  %v192 = vunpack.c.l.b16 %v44
  %v193 = vunpack.c.l.b16 %v45
  %v194 = vunpack.c.l.b16 %v46
  %v195 = vunpack.c.l.b16 %v47
  %v196 = vunpack.c.l.b16 %v48
  %v197 = vunpack.c.l.b16 %v49
  %v198 = vunpack.c.l.b16 %v50
  %v199 = vunpack.c.l.b16 %v51
  %v200 = vunpack.c.l.b16 %v52
  %v201 = vunpack.c.l.b16 %v53
  %v202 = vunpack.c.l.b16 %v54
  %v203 = vunpack.c.l.b16 %v55
  %v204 = vunpack.c.l.b16 %v56
  %v205 = vunpack.c.l.b16 %v57
  %v206 = vunpack.c.l.b16 %v58
  %v207 = vunpack.c.l.b16 %v59
  %v208 = vunpack.c.l.b16 %v60
  %v209 = vunpack.c.l.b16 %v61
  %v210 = vunpack.c.l.b16 %v62
  %v211 = vunpack.c.l.b16 %v63
  %v212 = vunpack.c.l.b16 %v64
  %v213 = vunpack.c.l.b16 %v65
  %v214 = vunpack.c.l.b16 %v66
  %v215 = vunpack.c.l.b16 %v67
  %v216 = vunpack.c.l.b16 %v68
  %v217 = vunpack.c.l.b16 %v69
  %v218 = vunpack.c.l.b16 %v70
  %v219 = vunpack.c.l.b16 %v71
  %v220 = vunpack.c.l.b16 %v72
  %v221 = vunpack.c.l.b16 %v73
  %v222 = vunpack.c.l.b16 %v74
  %v223 = vunpack.c.l.b16 %v75
  %v224 = vunpack.c.l.b16 %v76
  %v225 = vunpack.c.l.b16 %v77
  %v226 = vpack.c.b16 %v163, %v162
  %v227 = vpack.c.b16 %v165, %v164
  %v228 = vpack.c.b16 %v167, %v166
  %v229 = vpack.c.b16 %v169, %v168
  %v230 = vpack.c.b16 %v171, %v170
  %v231 = vpack.c.b16 %v173, %v172
  %v232 = vpack.c.b16 %v175, %v174
  %v233 = vpack.c.b16 %v177, %v176
  %v234 = vpack.c.b16 %v179, %v178
  %v235 = vpack.c.b16 %v181, %v180
  %v236 = vpack.c.b16 %v183, %v182
  %v237 = vpack.c.b16 %v185, %v184
  %v238 = vpack.c.b16 %v187, %v186
  %v239 = vpack.c.b16 %v189, %v188
  %v240 = vpack.c.b16 %v191, %v190
  %v241 = vpack.c.b16 %v193, %v192
  %v242 = vpack.c.b16 %v195, %v194
  %v243 = vpack.c.b16 %v197, %v196
  %v244 = vpack.c.b16 %v199, %v198
  %v245 = vpack.c.b16 %v201, %v200
  %v246 = vpack.c.b16 %v203, %v202
  %v247 = vpack.c.b16 %v205, %v204
  %v248 = vpack.c.b16 %v207, %v206
  %v249 = vpack.c.b16 %v209, %v208
  %v250 = vpack.c.b16 %v211, %v210
  %v251 = vpack.c.b16 %v213, %v212
  %v252 = vpack.c.b16 %v215, %v214
  %v253 = vpack.c.b16 %v217, %v216
  %v254 = vpack.c.b16 %v219, %v218
  %v255 = vpack.c.b16 %v221, %v220
  %v256 = vpack.c.b16 %v223, %v222
  %v257 = vpack.c.b16 %v225, %v224
  %v306 = vunpack.c.l.b16 %v78
  %v307 = vunpack.c.l.b16 %v79
  %v308 = vunpack.c.l.b16 %v80
  %v309 = vunpack.c.l.b16 %v81
  %v310 = vunpack.c.l.b16 %v82
  %v311 = vunpack.c.l.b16 %v83
  %v312 = vunpack.c.l.b16 %v84
  %v313 = vunpack.c.l.b16 %v85
  %v314 = vunpack.c.l.b16 %v86
  %v315 = vunpack.c.l.b16 %v87
  %v316 = vunpack.c.l.b16 %v88
  %v317 = vunpack.c.l.b16 %v89
  %v318 = vunpack.c.l.b16 %v90
  %v319 = vunpack.c.l.b16 %v91
  %v320 = vunpack.c.l.b16 %v92
  %v321 = vunpack.c.l.b16 %v93
  %v322 = vpack.c.b16 %v307, %v306
  %v323 = vpack.c.b16 %v309, %v308
  %v324 = vpack.c.b16 %v311, %v310
  %v325 = vpack.c.b16 %v313, %v312
  %v326 = vpack.c.b16 %v315, %v314
  %v327 = vpack.c.b16 %v317, %v316
  %v328 = vpack.c.b16 %v319, %v318
  %v329 = vpack.c.b16 %v321, %v320
  %338 = vmatpush.bf16.msra.mxu0 %v329
  %339 = vmatpush.bf16.msra.mxu0 %v328
  %340 = vmatpush.bf16.msra.mxu0 %v327
  %341 = vmatpush.bf16.msra.mxu0 %v326
  %342 = vmatpush.bf16.msra.mxu0 %v325
  %343 = vmatpush.bf16.msra.mxu0 %v324
  %344 = vmatpush.bf16.msra.mxu0 %v323
  %345 = vmatpush.bf16.msra.mxu0 %v322
  %346 = vmatmul.bf16.gmra.mxu0 %v226
  %v347 = vpop.f32.mrf.mxu0
  %v348 = vadd.f32 %v96, %v347
  %v349 = vpop.f32.mrf.mxu0
  %v350 = vadd.f32 %v96, %v349
  %351 = vmatmul.bf16.gmra.mxu0 %v227
  %v352 = vpop.f32.mrf.mxu0
  %v353 = vadd.f32 %v96, %v352
  %v354 = vpop.f32.mrf.mxu0
  %v355 = vadd.f32 %v96, %v354
  %356 = vmatmul.bf16.gmra.mxu0 %v228
  %v357 = vpop.f32.mrf.mxu0
  %v358 = vadd.f32 %v96, %v357
  %v359 = vpop.f32.mrf.mxu0
  %v360 = vadd.f32 %v96, %v359
  %361 = vmatmul.bf16.gmra.mxu0 %v229
  %v362 = vpop.f32.mrf.mxu0
  %v363 = vadd.f32 %v96, %v362
  %v364 = vpop.f32.mrf.mxu0
  %v365 = vadd.f32 %v96, %v364
  %366 = vmatmul.bf16.gmra.mxu0 %v230
  %v367 = vpop.f32.mrf.mxu0
  %v368 = vadd.f32 %v96, %v367
  %v369 = vpop.f32.mrf.mxu0
  %v370 = vadd.f32 %v96, %v369
  %371 = vmatmul.bf16.gmra.mxu0 %v231
  %v372 = vpop.f32.mrf.mxu0
  %v373 = vadd.f32 %v96, %v372
  %v374 = vpop.f32.mrf.mxu0
  %v375 = vadd.f32 %v96, %v374
  %376 = vmatmul.bf16.gmra.mxu0 %v232
  %v377 = vpop.f32.mrf.mxu0
  %v378 = vadd.f32 %v96, %v377
  %v379 = vpop.f32.mrf.mxu0
  %v380 = vadd.f32 %v96, %v379
  %381 = vmatmul.bf16.gmra.mxu0 %v233
  %v382 = vpop.f32.mrf.mxu0
  %v383 = vadd.f32 %v96, %v382
  %v384 = vpop.f32.mrf.mxu0
  %v385 = vadd.f32 %v96, %v384
  %386 = vmatmul.bf16.gmra.mxu0 %v234
  %v387 = vpop.f32.mrf.mxu0
  %v388 = vadd.f32 %v96, %v387
  %v389 = vpop.f32.mrf.mxu0
  %v390 = vadd.f32 %v96, %v389
  %391 = vmatmul.bf16.gmra.mxu0 %v235
  %v392 = vpop.f32.mrf.mxu0
  %v393 = vadd.f32 %v96, %v392
  %v394 = vpop.f32.mrf.mxu0
  %v395 = vadd.f32 %v96, %v394
  %396 = vmatmul.bf16.gmra.mxu0 %v236
  %v397 = vpop.f32.mrf.mxu0
  %v398 = vadd.f32 %v96, %v397
  %v399 = vpop.f32.mrf.mxu0
  %v400 = vadd.f32 %v96, %v399
  %401 = vmatmul.bf16.gmra.mxu0 %v237
  %v402 = vpop.f32.mrf.mxu0
  %v403 = vadd.f32 %v96, %v402
  %v404 = vpop.f32.mrf.mxu0
  %v405 = vadd.f32 %v96, %v404
  %406 = vmatmul.bf16.gmra.mxu0 %v238
  %v407 = vpop.f32.mrf.mxu0
  %v408 = vadd.f32 %v96, %v407
  %v409 = vpop.f32.mrf.mxu0
  %v410 = vadd.f32 %v96, %v409
  %411 = vmatmul.bf16.gmra.mxu0 %v239
  %v412 = vpop.f32.mrf.mxu0
  %v413 = vadd.f32 %v96, %v412
  %v414 = vpop.f32.mrf.mxu0
  %v415 = vadd.f32 %v96, %v414
  %416 = vmatmul.bf16.gmra.mxu0 %v240
  %v417 = vpop.f32.mrf.mxu0
  %v418 = vadd.f32 %v96, %v417
  %v419 = vpop.f32.mrf.mxu0
  %v420 = vadd.f32 %v96, %v419
  %421 = vmatmul.bf16.gmra.mxu0 %v241
  %v422 = vpop.f32.mrf.mxu0
  %v423 = vadd.f32 %v96, %v422
  %v424 = vpop.f32.mrf.mxu0
  %v425 = vadd.f32 %v96, %v424
  %426 = vmatmul.bf16.gmra.mxu0 %v242
  %v427 = vpop.f32.mrf.mxu0
  %v428 = vadd.f32 %v96, %v427
  %v429 = vpop.f32.mrf.mxu0
  %v430 = vadd.f32 %v96, %v429
  %431 = vmatmul.bf16.gmra.mxu0 %v243
  %v432 = vpop.f32.mrf.mxu0
  %v433 = vadd.f32 %v96, %v432
  %v434 = vpop.f32.mrf.mxu0
  %v435 = vadd.f32 %v96, %v434
  %436 = vmatmul.bf16.gmra.mxu0 %v244
  %v437 = vpop.f32.mrf.mxu0
  %v438 = vadd.f32 %v96, %v437
  %v439 = vpop.f32.mrf.mxu0
  %v440 = vadd.f32 %v96, %v439
  %441 = vmatmul.bf16.gmra.mxu0 %v245
  %v442 = vpop.f32.mrf.mxu0
  %v443 = vadd.f32 %v96, %v442
  %v444 = vpop.f32.mrf.mxu0
  %v445 = vadd.f32 %v96, %v444
  %446 = vmatmul.bf16.gmra.mxu0 %v246
  %v447 = vpop.f32.mrf.mxu0
  %v448 = vadd.f32 %v96, %v447
  %v449 = vpop.f32.mrf.mxu0
  %v450 = vadd.f32 %v96, %v449
  %451 = vmatmul.bf16.gmra.mxu0 %v247
  %v452 = vpop.f32.mrf.mxu0
  %v453 = vadd.f32 %v96, %v452
  %v454 = vpop.f32.mrf.mxu0
  %v455 = vadd.f32 %v96, %v454
  %456 = vmatmul.bf16.gmra.mxu0 %v248
  %v457 = vpop.f32.mrf.mxu0
  %v458 = vadd.f32 %v96, %v457
  %v459 = vpop.f32.mrf.mxu0
  %v460 = vadd.f32 %v96, %v459
  %461 = vmatmul.bf16.gmra.mxu0 %v249
  %v462 = vpop.f32.mrf.mxu0
  %v463 = vadd.f32 %v96, %v462
  %v464 = vpop.f32.mrf.mxu0
  %v465 = vadd.f32 %v96, %v464
  %466 = vmatmul.bf16.gmra.mxu0 %v250
  %v467 = vpop.f32.mrf.mxu0
  %v468 = vadd.f32 %v96, %v467
  %v469 = vpop.f32.mrf.mxu0
  %v470 = vadd.f32 %v96, %v469
  %471 = vmatmul.bf16.gmra.mxu0 %v251
  %v472 = vpop.f32.mrf.mxu0
  %v473 = vadd.f32 %v96, %v472
  %v474 = vpop.f32.mrf.mxu0
  %v475 = vadd.f32 %v96, %v474
  %476 = vmatmul.bf16.gmra.mxu0 %v252
  %v477 = vpop.f32.mrf.mxu0
  %v478 = vadd.f32 %v96, %v477
  %v479 = vpop.f32.mrf.mxu0
  %v480 = vadd.f32 %v96, %v479
  %481 = vmatmul.bf16.gmra.mxu0 %v253
  %v482 = vpop.f32.mrf.mxu0
  %v483 = vadd.f32 %v96, %v482
  %v484 = vpop.f32.mrf.mxu0
  %v485 = vadd.f32 %v96, %v484
  %486 = vmatmul.bf16.gmra.mxu0 %v254
  %v487 = vpop.f32.mrf.mxu0
  %v488 = vadd.f32 %v96, %v487
  %v489 = vpop.f32.mrf.mxu0
  %v490 = vadd.f32 %v96, %v489
  %491 = vmatmul.bf16.gmra.mxu0 %v255
  %v492 = vpop.f32.mrf.mxu0
  %v493 = vadd.f32 %v96, %v492
  %v494 = vpop.f32.mrf.mxu0
  %v495 = vadd.f32 %v96, %v494
  %496 = vmatmul.bf16.gmra.mxu0 %v256
  %v497 = vpop.f32.mrf.mxu0
  %v498 = vadd.f32 %v96, %v497
  %v499 = vpop.f32.mrf.mxu0
  %v500 = vadd.f32 %v96, %v499
  %501 = vmatmul.bf16.gmra.mxu0 %v257
  %v502 = vpop.f32.mrf.mxu0
  %v503 = vadd.f32 %v96, %v502
  %v504 = vpop.f32.mrf.mxu0
  %v505 = vadd.f32 %v96, %v504
  %506 = vdwg.mxu0
  %v507 = vmax.f32 %v348, 0.0
  %v508 = vmax.f32 %v350, 0.0
  %v509 = vmax.f32 %v353, 0.0
  %v510 = vmax.f32 %v355, 0.0
  %v511 = vmax.f32 %v358, 0.0
  %v512 = vmax.f32 %v360, 0.0
  %v513 = vmax.f32 %v363, 0.0
  %v514 = vmax.f32 %v365, 0.0
  %v515 = vmax.f32 %v368, 0.0
  %v516 = vmax.f32 %v370, 0.0
  %v517 = vmax.f32 %v373, 0.0
  %v518 = vmax.f32 %v375, 0.0
  %v519 = vmax.f32 %v378, 0.0
  %v520 = vmax.f32 %v380, 0.0
  %v521 = vmax.f32 %v383, 0.0
  %v522 = vmax.f32 %v385, 0.0
  %v523 = vmax.f32 %v388, 0.0
  %v524 = vmax.f32 %v390, 0.0
  %v525 = vmax.f32 %v393, 0.0
  %v526 = vmax.f32 %v395, 0.0
  %v527 = vmax.f32 %v398, 0.0
  %v528 = vmax.f32 %v400, 0.0
  %v529 = vmax.f32 %v403, 0.0
  %v530 = vmax.f32 %v405, 0.0
  %v531 = vmax.f32 %v408, 0.0
  %v532 = vmax.f32 %v410, 0.0
  %v533 = vmax.f32 %v413, 0.0
  %v534 = vmax.f32 %v415, 0.0
  %v535 = vmax.f32 %v418, 0.0
  %v536 = vmax.f32 %v420, 0.0
  %v537 = vmax.f32 %v423, 0.0
  %v538 = vmax.f32 %v425, 0.0
  %v539 = vmax.f32 %v428, 0.0
  %v540 = vmax.f32 %v430, 0.0
  %v541 = vmax.f32 %v433, 0.0
  %v542 = vmax.f32 %v435, 0.0
  %v543 = vmax.f32 %v438, 0.0
  %v544 = vmax.f32 %v440, 0.0
  %v545 = vmax.f32 %v443, 0.0
  %v546 = vmax.f32 %v445, 0.0
  %v547 = vmax.f32 %v448, 0.0
  %v548 = vmax.f32 %v450, 0.0
  %v549 = vmax.f32 %v453, 0.0
  %v550 = vmax.f32 %v455, 0.0
  %v551 = vmax.f32 %v458, 0.0
  %v552 = vmax.f32 %v460, 0.0
  %v553 = vmax.f32 %v463, 0.0
  %v554 = vmax.f32 %v465, 0.0
  %v555 = vmax.f32 %v468, 0.0
  %v556 = vmax.f32 %v470, 0.0
  %v557 = vmax.f32 %v473, 0.0
  %v558 = vmax.f32 %v475, 0.0
  %v559 = vmax.f32 %v478, 0.0
  %v560 = vmax.f32 %v480, 0.0
  %v561 = vmax.f32 %v483, 0.0
  %v562 = vmax.f32 %v485, 0.0
  %v563 = vmax.f32 %v488, 0.0
  %v564 = vmax.f32 %v490, 0.0
  %v565 = vmax.f32 %v493, 0.0
  %v566 = vmax.f32 %v495, 0.0
  %v567 = vmax.f32 %v498, 0.0
  %v568 = vmax.f32 %v500, 0.0
  %v569 = vmax.f32 %v503, 0.0
  %v570 = vmax.f32 %v505, 0.0
  %v571 = vpack.c.bf16 %v507, %v507
  %v572 = vpack.c.bf16 %v508, %v508
  %v573 = vpack.c.bf16 %v509, %v509
  %v574 = vpack.c.bf16 %v510, %v510
  %v575 = vpack.c.bf16 %v511, %v511
  %v576 = vpack.c.bf16 %v512, %v512
  %v577 = vpack.c.bf16 %v513, %v513
  %v578 = vpack.c.bf16 %v514, %v514
  %v579 = vpack.c.bf16 %v515, %v515
  %v580 = vpack.c.bf16 %v516, %v516
  %v581 = vpack.c.bf16 %v517, %v517
  %v582 = vpack.c.bf16 %v518, %v518
  %v583 = vpack.c.bf16 %v519, %v519
  %v584 = vpack.c.bf16 %v520, %v520
  %v585 = vpack.c.bf16 %v521, %v521
  %v586 = vpack.c.bf16 %v522, %v522
  %v587 = vpack.c.bf16 %v523, %v523
  %v588 = vpack.c.bf16 %v524, %v524
  %v589 = vpack.c.bf16 %v525, %v525
  %v590 = vpack.c.bf16 %v526, %v526
  %v591 = vpack.c.bf16 %v527, %v527
  %v592 = vpack.c.bf16 %v528, %v528
  %v593 = vpack.c.bf16 %v529, %v529
  %v594 = vpack.c.bf16 %v530, %v530
  %v595 = vpack.c.bf16 %v531, %v531
  %v596 = vpack.c.bf16 %v532, %v532
  %v597 = vpack.c.bf16 %v533, %v533
  %v598 = vpack.c.bf16 %v534, %v534
  %v599 = vpack.c.bf16 %v535, %v535
  %v600 = vpack.c.bf16 %v536, %v536
  %v601 = vpack.c.bf16 %v537, %v537
  %v602 = vpack.c.bf16 %v538, %v538
  %v603 = vpack.c.bf16 %v539, %v539
  %v604 = vpack.c.bf16 %v540, %v540
  %v605 = vpack.c.bf16 %v541, %v541
  %v606 = vpack.c.bf16 %v542, %v542
  %v607 = vpack.c.bf16 %v543, %v543
  %v608 = vpack.c.bf16 %v544, %v544
  %v609 = vpack.c.bf16 %v545, %v545
  %v610 = vpack.c.bf16 %v546, %v546
  %v611 = vpack.c.bf16 %v547, %v547
  %v612 = vpack.c.bf16 %v548, %v548
  %v613 = vpack.c.bf16 %v549, %v549
  %v614 = vpack.c.bf16 %v550, %v550
  %v615 = vpack.c.bf16 %v551, %v551
  %v616 = vpack.c.bf16 %v552, %v552
  %v617 = vpack.c.bf16 %v553, %v553
  %v618 = vpack.c.bf16 %v554, %v554
  %v619 = vpack.c.bf16 %v555, %v555
  %v620 = vpack.c.bf16 %v556, %v556
  %v621 = vpack.c.bf16 %v557, %v557
  %v622 = vpack.c.bf16 %v558, %v558
  %v623 = vpack.c.bf16 %v559, %v559
  %v624 = vpack.c.bf16 %v560, %v560
  %v625 = vpack.c.bf16 %v561, %v561
  %v626 = vpack.c.bf16 %v562, %v562
  %v627 = vpack.c.bf16 %v563, %v563
  %v628 = vpack.c.bf16 %v564, %v564
  %v629 = vpack.c.bf16 %v565, %v565
  %v630 = vpack.c.bf16 %v566, %v566
  %v631 = vpack.c.bf16 %v567, %v567
  %v632 = vpack.c.bf16 %v568, %v568
  %v633 = vpack.c.bf16 %v569, %v569
  %v634 = vpack.c.bf16 %v570, %v570
  %635 = vst [vmem:[%s3] sm:$0xf] %v571
  %636 = vst [vmem:[%s3 + $0x4] sm:$0xf] %v572
  %637 = vst [vmem:[%s3 + $0x8] sm:$0xf] %v573
  %638 = vst [vmem:[%s3 + $0xc] sm:$0xf] %v574
  %639 = vst [vmem:[%s3 + $0x10] sm:$0xf] %v575
  %640 = vst [vmem:[%s3 + $0x14] sm:$0xf] %v576
  %641 = vst [vmem:[%s3 + $0x18] sm:$0xf] %v577
  %642 = vst [vmem:[%s3 + $0x1c] sm:$0xf] %v578
  %643 = vst [vmem:[%s3 + $0x20] sm:$0xf] %v579
  %644 = vst [vmem:[%s3 + $0x24] sm:$0xf] %v580
  %645 = vst [vmem:[%s3 + $0x28] sm:$0xf] %v581
  %646 = vst [vmem:[%s3 + $0x2c] sm:$0xf] %v582
  %647 = vst [vmem:[%s3 + $0x30] sm:$0xf] %v583
  %648 = vst [vmem:[%s3 + $0x34] sm:$0xf] %v584
  %649 = vst [vmem:[%s3 + $0x38] sm:$0xf] %v585
  %650 = vst [vmem:[%s3 + $0x3c] sm:$0xf] %v586
  %651 = vst [vmem:[%s3 + $0x40] sm:$0xf] %v587
  %652 = vst [vmem:[%s3 + $0x44] sm:$0xf] %v588
  %653 = vst [vmem:[%s3 + $0x48] sm:$0xf] %v589
  %654 = vst [vmem:[%s3 + $0x4c] sm:$0xf] %v590
  %655 = vst [vmem:[%s3 + $0x50] sm:$0xf] %v591
  %656 = vst [vmem:[%s3 + $0x54] sm:$0xf] %v592
  %657 = vst [vmem:[%s3 + $0x58] sm:$0xf] %v593
  %658 = vst [vmem:[%s3 + $0x5c] sm:$0xf] %v594
  %659 = vst [vmem:[%s3 + $0x60] sm:$0xf] %v595
  %660 = vst [vmem:[%s3 + $0x64] sm:$0xf] %v596
  %661 = vst [vmem:[%s3 + $0x68] sm:$0xf] %v597
  %662 = vst [vmem:[%s3 + $0x6c] sm:$0xf] %v598
  %663 = vst [vmem:[%s3 + $0x70] sm:$0xf] %v599
  %664 = vst [vmem:[%s3 + $0x74] sm:$0xf] %v600
  %665 = vst [vmem:[%s3 + $0x78] sm:$0xf] %v601
  %666 = vst [vmem:[%s3 + $0x7c] sm:$0xf] %v602
  %667 = vst [vmem:[%s3 + $0x80] sm:$0xf] %v603
  %668 = vst [vmem:[%s3 + $0x84] sm:$0xf] %v604
  %669 = vst [vmem:[%s3 + $0x88] sm:$0xf] %v605
  %670 = vst [vmem:[%s3 + $0x8c] sm:$0xf] %v606
  %671 = vst [vmem:[%s3 + $0x90] sm:$0xf] %v607
  %672 = vst [vmem:[%s3 + $0x94] sm:$0xf] %v608
  %673 = vst [vmem:[%s3 + $0x98] sm:$0xf] %v609
  %674 = vst [vmem:[%s3 + $0x9c] sm:$0xf] %v610
  %675 = vst [vmem:[%s3 + $0xa0] sm:$0xf] %v611
  %676 = vst [vmem:[%s3 + $0xa4] sm:$0xf] %v612
  %677 = vst [vmem:[%s3 + $0xa8] sm:$0xf] %v613
  %678 = vst [vmem:[%s3 + $0xac] sm:$0xf] %v614
  %679 = vst [vmem:[%s3 + $0xb0] sm:$0xf] %v615
  %680 = vst [vmem:[%s3 + $0xb4] sm:$0xf] %v616
  %681 = vst [vmem:[%s3 + $0xb8] sm:$0xf] %v617
  %682 = vst [vmem:[%s3 + $0xbc] sm:$0xf] %v618
  %683 = vst [vmem:[%s3 + $0xc0] sm:$0xf] %v619
  %684 = vst [vmem:[%s3 + $0xc4] sm:$0xf] %v620
  %685 = vst [vmem:[%s3 + $0xc8] sm:$0xf] %v621
  %686 = vst [vmem:[%s3 + $0xcc] sm:$0xf] %v622
  %687 = vst [vmem:[%s3 + $0xd0] sm:$0xf] %v623
  %688 = vst [vmem:[%s3 + $0xd4] sm:$0xf] %v624
  %689 = vst [vmem:[%s3 + $0xd8] sm:$0xf] %v625
  %690 = vst [vmem:[%s3 + $0xdc] sm:$0xf] %v626
  %691 = vst [vmem:[%s3 + $0xe0] sm:$0xf] %v627
  %692 = vst [vmem:[%s3 + $0xe4] sm:$0xf] %v628
  %693 = vst [vmem:[%s3 + $0xe8] sm:$0xf] %v629
  %694 = vst [vmem:[%s3 + $0xec] sm:$0xf] %v630
  %695 = vst [vmem:[%s3 + $0xf0] sm:$0xf] %v631
  %696 = vst [vmem:[%s3 + $0xf4] sm:$0xf] %v632
  %697 = vst [vmem:[%s3 + $0xf8] sm:$0xf] %v633
  %698 = vst [vmem:[%s3 + $0xfc] sm:$0xf] %v634
  // Predicated region
  $region14: #{cifar10_ae_cls_forward.4} parent=0 // pred_check
    _
  $region15: #{cifar10_ae_cls_forward.4} parent=0 // pred_check_branch
    %700 = sbr.rel (0) target = $region17
  $region16: #{cifar10_ae_cls_forward.4} parent=0 // pred_region
    _
  $region17: #{cifar10_ae_cls_forward.4} parent=0 // pred_fallthru
    _
  // Predicated region
  $region18: #{cifar10_ae_cls_forward.4} parent=0 // pred_check
    _
  $region19: #{cifar10_ae_cls_forward.4} parent=0 // pred_check_branch
    %702 = sbr.rel (0) target = $region21
  $region20: #{cifar10_ae_cls_forward.4} parent=0 // pred_region
    _
  $region21: #{cifar10_ae_cls_forward.4} parent=0 // pred_fallthru
    _

// kernel: cifar10_ae_cls_forward.5
$region0: #{cifar10_ae_cls_forward.5}
  #allocation0 [shape = 'u32[]', space=smem, size = 0x4, offset = 0x4, fixed_abs, tag = 'smem constant byte address 0x4 - core index']
  #allocation1 [shape = 'u32[72,128]{1,0:T(1,128)}', space=vmem, size = 0x9000, scoped, tag = 'internal scratch']
  %s0 = inlined_call_operand.vmem [shape: bf16[128,256], index: 0, kind: input, shape index: {}]
  %s1 = inlined_call_operand.vmem [shape: bf16[256,128], index: 1, kind: input, shape index: {}]
  %s2 = inlined_call_operand.vmem [shape: f32[1,128], index: 2, kind: input, shape index: {}]
  %s3 = inlined_call_operand.vmem [shape: bf16[128,128], index: 3, kind: output, shape index: {}]
  %s4 = sld [smem:[#allocation0]]
  $region22: #{cifar10_ae_cls_forward.5} parent=0
    _
  %s6 = ssub.s32 1, %s4
  %s7 = scalar_select 0, %s6, %s4
  // Predicated region
  $region2: #{cifar10_ae_cls_forward.5} parent=0 // pred_check
    _
  $region3: #{cifar10_ae_cls_forward.5} parent=0 // pred_check_branch
    %9 = sbr.rel (0) target = $region5
  $region4: #{cifar10_ae_cls_forward.5} parent=0 // pred_region
    _
  $region5: #{cifar10_ae_cls_forward.5} parent=0 // pred_fallthru
    _
  // Predicated region
  $region6: #{cifar10_ae_cls_forward.5} parent=0 // pred_check
    _
  $region7: #{cifar10_ae_cls_forward.5} parent=0 // pred_check_branch
    %11 = sbr.rel (0) target = $region9
  $region8: #{cifar10_ae_cls_forward.5} parent=0 // pred_region
    _
  $region9: #{cifar10_ae_cls_forward.5} parent=0 // pred_fallthru
    _
  // Predicated region
  $region10: #{cifar10_ae_cls_forward.5} parent=0 // pred_check
    _
  $region11: #{cifar10_ae_cls_forward.5} parent=0 // pred_check_branch
    %13 = sbr.rel (0) target = $region13
  $region12: #{cifar10_ae_cls_forward.5} parent=0 // pred_region
    _
  $region13: #{cifar10_ae_cls_forward.5} parent=0 // pred_fallthru
    _
  %v14 = vld [vmem:[%s0] sm:$0xff]
  %v15 = vld [vmem:[%s0 + $0x8] sm:$0xff]
  %v16 = vld [vmem:[%s0 + $0x10] sm:$0xff]
  %v17 = vld [vmem:[%s0 + $0x18] sm:$0xff]
  %v18 = vld [vmem:[%s0 + $0x20] sm:$0xff]
  %v19 = vld [vmem:[%s0 + $0x28] sm:$0xff]
  %v20 = vld [vmem:[%s0 + $0x30] sm:$0xff]
  %v21 = vld [vmem:[%s0 + $0x38] sm:$0xff]
  %v22 = vld [vmem:[%s0 + $0x40] sm:$0xff]
  %v23 = vld [vmem:[%s0 + $0x48] sm:$0xff]
  %v24 = vld [vmem:[%s0 + $0x50] sm:$0xff]
  %v25 = vld [vmem:[%s0 + $0x58] sm:$0xff]
  %v26 = vld [vmem:[%s0 + $0x60] sm:$0xff]
  %v27 = vld [vmem:[%s0 + $0x68] sm:$0xff]
  %v28 = vld [vmem:[%s0 + $0x70] sm:$0xff]
  %v29 = vld [vmem:[%s0 + $0x78] sm:$0xff]
  %v30 = vld [vmem:[%s1] sm:$0xf]
  %v31 = vld [vmem:[%s1 + $0x4] sm:$0xf]
  %v32 = vld [vmem:[%s1 + $0x8] sm:$0xf]
  %v33 = vld [vmem:[%s1 + $0xc] sm:$0xf]
  %v34 = vld [vmem:[%s1 + $0x10] sm:$0xf]
  %v35 = vld [vmem:[%s1 + $0x14] sm:$0xf]
  %v36 = vld [vmem:[%s1 + $0x18] sm:$0xf]
  %v37 = vld [vmem:[%s1 + $0x1c] sm:$0xf]
  %v38 = vld [vmem:[%s1 + $0x20] sm:$0xf]
  %v39 = vld [vmem:[%s1 + $0x24] sm:$0xf]
  %v40 = vld [vmem:[%s1 + $0x28] sm:$0xf]
  %v41 = vld [vmem:[%s1 + $0x2c] sm:$0xf]
  %v42 = vld [vmem:[%s1 + $0x30] sm:$0xf]
  %v43 = vld [vmem:[%s1 + $0x34] sm:$0xf]
  %v44 = vld [vmem:[%s1 + $0x38] sm:$0xf]
  %v45 = vld [vmem:[%s1 + $0x3c] sm:$0xf]
  %v46 = vld [vmem:[%s1 + $0x40] sm:$0xf]
  %v47 = vld [vmem:[%s1 + $0x44] sm:$0xf]
  %v48 = vld [vmem:[%s1 + $0x48] sm:$0xf]
  %v49 = vld [vmem:[%s1 + $0x4c] sm:$0xf]
  %v50 = vld [vmem:[%s1 + $0x50] sm:$0xf]
  %v51 = vld [vmem:[%s1 + $0x54] sm:$0xf]
  %v52 = vld [vmem:[%s1 + $0x58] sm:$0xf]
  %v53 = vld [vmem:[%s1 + $0x5c] sm:$0xf]
  %v54 = vld [vmem:[%s1 + $0x60] sm:$0xf]
  %v55 = vld [vmem:[%s1 + $0x64] sm:$0xf]
  %v56 = vld [vmem:[%s1 + $0x68] sm:$0xf]
  %v57 = vld [vmem:[%s1 + $0x6c] sm:$0xf]
  %v58 = vld [vmem:[%s1 + $0x70] sm:$0xf]
  %v59 = vld [vmem:[%s1 + $0x74] sm:$0xf]
  %v60 = vld [vmem:[%s1 + $0x78] sm:$0xf]
  %v61 = vld [vmem:[%s1 + $0x7c] sm:$0xf]
  %v62 = vld [vmem:[%s2] sm:$0x1]
  %v64 = vperm.slane %v62, 0
  %v82 = vunpack.c.l.b16 %v14
  %v83 = vunpack.c.h.b16 %v14
  %v84 = vunpack.c.l.b16 %v15
  %v85 = vunpack.c.h.b16 %v15
  %v86 = vunpack.c.l.b16 %v16
  %v87 = vunpack.c.h.b16 %v16
  %v88 = vunpack.c.l.b16 %v17
  %v89 = vunpack.c.h.b16 %v17
  %v90 = vunpack.c.l.b16 %v18
  %v91 = vunpack.c.h.b16 %v18
  %v92 = vunpack.c.l.b16 %v19
  %v93 = vunpack.c.h.b16 %v19
  %v94 = vunpack.c.l.b16 %v20
  %v95 = vunpack.c.h.b16 %v20
  %v96 = vunpack.c.l.b16 %v21
  %v97 = vunpack.c.h.b16 %v21
  %v98 = vunpack.c.l.b16 %v22
  %v99 = vunpack.c.h.b16 %v22
  %v100 = vunpack.c.l.b16 %v23
  %v101 = vunpack.c.h.b16 %v23
  %v102 = vunpack.c.l.b16 %v24
  %v103 = vunpack.c.h.b16 %v24
  %v104 = vunpack.c.l.b16 %v25
  %v105 = vunpack.c.h.b16 %v25
  %v106 = vunpack.c.l.b16 %v26
  %v107 = vunpack.c.h.b16 %v26
  %v108 = vunpack.c.l.b16 %v27
  %v109 = vunpack.c.h.b16 %v27
  %v110 = vunpack.c.l.b16 %v28
  %v111 = vunpack.c.h.b16 %v28
  %v112 = vunpack.c.l.b16 %v29
  %v113 = vunpack.c.h.b16 %v29
  %v114 = vpack.c.b16 %v84, %v82
  %v115 = vpack.c.b16 %v85, %v83
  %v116 = vpack.c.b16 %v88, %v86
  %v117 = vpack.c.b16 %v89, %v87
  %v118 = vpack.c.b16 %v92, %v90
  %v119 = vpack.c.b16 %v93, %v91
  %v120 = vpack.c.b16 %v96, %v94
  %v121 = vpack.c.b16 %v97, %v95
  %v122 = vpack.c.b16 %v100, %v98
  %v123 = vpack.c.b16 %v101, %v99
  %v124 = vpack.c.b16 %v104, %v102
  %v125 = vpack.c.b16 %v105, %v103
  %v126 = vpack.c.b16 %v108, %v106
  %v127 = vpack.c.b16 %v109, %v107
  %v128 = vpack.c.b16 %v112, %v110
  %v129 = vpack.c.b16 %v113, %v111
  %v178 = vunpack.c.l.b16 %v30
  %v179 = vunpack.c.l.b16 %v31
  %v180 = vunpack.c.l.b16 %v32
  %v181 = vunpack.c.l.b16 %v33
  %v182 = vunpack.c.l.b16 %v34
  %v183 = vunpack.c.l.b16 %v35
  %v184 = vunpack.c.l.b16 %v36
  %v185 = vunpack.c.l.b16 %v37
  %v186 = vunpack.c.l.b16 %v38
  %v187 = vunpack.c.l.b16 %v39
  %v188 = vunpack.c.l.b16 %v40
  %v189 = vunpack.c.l.b16 %v41
  %v190 = vunpack.c.l.b16 %v42
  %v191 = vunpack.c.l.b16 %v43
  %v192 = vunpack.c.l.b16 %v44
  %v193 = vunpack.c.l.b16 %v45
  %v194 = vunpack.c.l.b16 %v46
  %v195 = vunpack.c.l.b16 %v47
  %v196 = vunpack.c.l.b16 %v48
  %v197 = vunpack.c.l.b16 %v49
  %v198 = vunpack.c.l.b16 %v50
  %v199 = vunpack.c.l.b16 %v51
  %v200 = vunpack.c.l.b16 %v52
  %v201 = vunpack.c.l.b16 %v53
  %v202 = vunpack.c.l.b16 %v54
  %v203 = vunpack.c.l.b16 %v55
  %v204 = vunpack.c.l.b16 %v56
  %v205 = vunpack.c.l.b16 %v57
  %v206 = vunpack.c.l.b16 %v58
  %v207 = vunpack.c.l.b16 %v59
  %v208 = vunpack.c.l.b16 %v60
  %v209 = vunpack.c.l.b16 %v61
  %v210 = vpack.c.b16 %v179, %v178
  %v211 = vpack.c.b16 %v181, %v180
  %v212 = vpack.c.b16 %v183, %v182
  %v213 = vpack.c.b16 %v185, %v184
  %v214 = vpack.c.b16 %v187, %v186
  %v215 = vpack.c.b16 %v189, %v188
  %v216 = vpack.c.b16 %v191, %v190
  %v217 = vpack.c.b16 %v193, %v192
  %v218 = vpack.c.b16 %v195, %v194
  %v219 = vpack.c.b16 %v197, %v196
  %v220 = vpack.c.b16 %v199, %v198
  %v221 = vpack.c.b16 %v201, %v200
  %v222 = vpack.c.b16 %v203, %v202
  %v223 = vpack.c.b16 %v205, %v204
  %v224 = vpack.c.b16 %v207, %v206
  %v225 = vpack.c.b16 %v209, %v208
  %242 = vmatpush.bf16.msra.mxu0 %v217
  %243 = vmatpush.bf16.msra.mxu0 %v216
  %244 = vmatpush.bf16.msra.mxu0 %v215
  %245 = vmatpush.bf16.msra.mxu0 %v214
  %246 = vmatpush.bf16.msra.mxu0 %v213
  %247 = vmatpush.bf16.msra.mxu0 %v212
  %248 = vmatpush.bf16.msra.mxu0 %v211
  %249 = vmatpush.bf16.msra.mxu0 %v210
  %250 = vmatmul.bf16.gmra.mxu0 %v114
  %v251 = vpop.f32.mrf.mxu0
  %v252 = vadd.f32 %v64, %v251
  %v253 = vpop.f32.mrf.mxu0
  %v254 = vadd.f32 %v64, %v253
  %255 = vmatmul.bf16.gmra.mxu0 %v116
  %v256 = vpop.f32.mrf.mxu0
  %v257 = vadd.f32 %v64, %v256
  %v258 = vpop.f32.mrf.mxu0
  %v259 = vadd.f32 %v64, %v258
  %260 = vmatmul.bf16.gmra.mxu0 %v118
  %v261 = vpop.f32.mrf.mxu0
  %v262 = vadd.f32 %v64, %v261
  %v263 = vpop.f32.mrf.mxu0
  %v264 = vadd.f32 %v64, %v263
  %265 = vmatmul.bf16.gmra.mxu0 %v120
  %v266 = vpop.f32.mrf.mxu0
  %v267 = vadd.f32 %v64, %v266
  %v268 = vpop.f32.mrf.mxu0
  %v269 = vadd.f32 %v64, %v268
  %270 = vmatmul.bf16.gmra.mxu0 %v122
  %v271 = vpop.f32.mrf.mxu0
  %v272 = vadd.f32 %v64, %v271
  %v273 = vpop.f32.mrf.mxu0
  %v274 = vadd.f32 %v64, %v273
  %275 = vmatmul.bf16.gmra.mxu0 %v124
  %v276 = vpop.f32.mrf.mxu0
  %v277 = vadd.f32 %v64, %v276
  %v278 = vpop.f32.mrf.mxu0
  %v279 = vadd.f32 %v64, %v278
  %280 = vmatmul.bf16.gmra.mxu0 %v126
  %v281 = vpop.f32.mrf.mxu0
  %v282 = vadd.f32 %v64, %v281
  %v283 = vpop.f32.mrf.mxu0
  %v284 = vadd.f32 %v64, %v283
  %285 = vmatmul.bf16.gmra.mxu0 %v128
  %v286 = vpop.f32.mrf.mxu0
  %v287 = vadd.f32 %v64, %v286
  %v288 = vpop.f32.mrf.mxu0
  %v289 = vadd.f32 %v64, %v288
  %290 = vdwg.mxu0
  %291 = vmatpush.bf16.msra.mxu0 %v225
  %292 = vmatpush.bf16.msra.mxu0 %v224
  %293 = vmatpush.bf16.msra.mxu0 %v223
  %294 = vmatpush.bf16.msra.mxu0 %v222
  %295 = vmatpush.bf16.msra.mxu0 %v221
  %296 = vmatpush.bf16.msra.mxu0 %v220
  %297 = vmatpush.bf16.msra.mxu0 %v219
  %298 = vmatpush.bf16.msra.mxu0 %v218
  %299 = vmatmul.bf16.gmra.mxu0 %v115
  %v300 = vpop.f32.mrf.mxu0
  %v301 = vadd.f32 %v252, %v300
  %v302 = vpop.f32.mrf.mxu0
  %v303 = vadd.f32 %v254, %v302
  %304 = vmatmul.bf16.gmra.mxu0 %v117
  %v305 = vpop.f32.mrf.mxu0
  %v306 = vadd.f32 %v257, %v305
  %v307 = vpop.f32.mrf.mxu0
  %v308 = vadd.f32 %v259, %v307
  %309 = vmatmul.bf16.gmra.mxu0 %v119
  %v310 = vpop.f32.mrf.mxu0
  %v311 = vadd.f32 %v262, %v310
  %v312 = vpop.f32.mrf.mxu0
  %v313 = vadd.f32 %v264, %v312
  %314 = vmatmul.bf16.gmra.mxu0 %v121
  %v315 = vpop.f32.mrf.mxu0
  %v316 = vadd.f32 %v267, %v315
  %v317 = vpop.f32.mrf.mxu0
  %v318 = vadd.f32 %v269, %v317
  %319 = vmatmul.bf16.gmra.mxu0 %v123
  %v320 = vpop.f32.mrf.mxu0
  %v321 = vadd.f32 %v272, %v320
  %v322 = vpop.f32.mrf.mxu0
  %v323 = vadd.f32 %v274, %v322
  %324 = vmatmul.bf16.gmra.mxu0 %v125
  %v325 = vpop.f32.mrf.mxu0
  %v326 = vadd.f32 %v277, %v325
  %v327 = vpop.f32.mrf.mxu0
  %v328 = vadd.f32 %v279, %v327
  %329 = vmatmul.bf16.gmra.mxu0 %v127
  %v330 = vpop.f32.mrf.mxu0
  %v331 = vadd.f32 %v282, %v330
  %v332 = vpop.f32.mrf.mxu0
  %v333 = vadd.f32 %v284, %v332
  %334 = vmatmul.bf16.gmra.mxu0 %v129
  %v335 = vpop.f32.mrf.mxu0
  %v336 = vadd.f32 %v287, %v335
  %v337 = vpop.f32.mrf.mxu0
  %v338 = vadd.f32 %v289, %v337
  %339 = vdwg.mxu0
  %v340 = vmax.f32 %v301, 0.0
  %v341 = vmax.f32 %v303, 0.0
  %v342 = vmax.f32 %v306, 0.0
  %v343 = vmax.f32 %v308, 0.0
  %v344 = vmax.f32 %v311, 0.0
  %v345 = vmax.f32 %v313, 0.0
  %v346 = vmax.f32 %v316, 0.0
  %v347 = vmax.f32 %v318, 0.0
  %v348 = vmax.f32 %v321, 0.0
  %v349 = vmax.f32 %v323, 0.0
  %v350 = vmax.f32 %v326, 0.0
  %v351 = vmax.f32 %v328, 0.0
  %v352 = vmax.f32 %v331, 0.0
  %v353 = vmax.f32 %v333, 0.0
  %v354 = vmax.f32 %v336, 0.0
  %v355 = vmax.f32 %v338, 0.0
  %v356 = vpack.c.bf16 %v340, %v340
  %v357 = vpack.c.bf16 %v341, %v341
  %v358 = vpack.c.bf16 %v342, %v342
  %v359 = vpack.c.bf16 %v343, %v343
  %v360 = vpack.c.bf16 %v344, %v344
  %v361 = vpack.c.bf16 %v345, %v345
  %v362 = vpack.c.bf16 %v346, %v346
  %v363 = vpack.c.bf16 %v347, %v347
  %v364 = vpack.c.bf16 %v348, %v348
  %v365 = vpack.c.bf16 %v349, %v349
  %v366 = vpack.c.bf16 %v350, %v350
  %v367 = vpack.c.bf16 %v351, %v351
  %v368 = vpack.c.bf16 %v352, %v352
  %v369 = vpack.c.bf16 %v353, %v353
  %v370 = vpack.c.bf16 %v354, %v354
  %v371 = vpack.c.bf16 %v355, %v355
  %372 = vst [vmem:[%s3] sm:$0xf] %v356
  %373 = vst [vmem:[%s3 + $0x4] sm:$0xf] %v357
  %374 = vst [vmem:[%s3 + $0x8] sm:$0xf] %v358
  %375 = vst [vmem:[%s3 + $0xc] sm:$0xf] %v359
  %376 = vst [vmem:[%s3 + $0x10] sm:$0xf] %v360
  %377 = vst [vmem:[%s3 + $0x14] sm:$0xf] %v361
  %378 = vst [vmem:[%s3 + $0x18] sm:$0xf] %v362
  %379 = vst [vmem:[%s3 + $0x1c] sm:$0xf] %v363
  %380 = vst [vmem:[%s3 + $0x20] sm:$0xf] %v364
  %381 = vst [vmem:[%s3 + $0x24] sm:$0xf] %v365
  %382 = vst [vmem:[%s3 + $0x28] sm:$0xf] %v366
  %383 = vst [vmem:[%s3 + $0x2c] sm:$0xf] %v367
  %384 = vst [vmem:[%s3 + $0x30] sm:$0xf] %v368
  %385 = vst [vmem:[%s3 + $0x34] sm:$0xf] %v369
  %386 = vst [vmem:[%s3 + $0x38] sm:$0xf] %v370
  %387 = vst [vmem:[%s3 + $0x3c] sm:$0xf] %v371
  // Predicated region
  $region14: #{cifar10_ae_cls_forward.5} parent=0 // pred_check
    _
  $region15: #{cifar10_ae_cls_forward.5} parent=0 // pred_check_branch
    %389 = sbr.rel (0) target = $region17
  $region16: #{cifar10_ae_cls_forward.5} parent=0 // pred_region
    _
  $region17: #{cifar10_ae_cls_forward.5} parent=0 // pred_fallthru
    _
  // Predicated region
  $region18: #{cifar10_ae_cls_forward.5} parent=0 // pred_check
    _
  $region19: #{cifar10_ae_cls_forward.5} parent=0 // pred_check_branch
    %391 = sbr.rel (0) target = $region21
  $region20: #{cifar10_ae_cls_forward.5} parent=0 // pred_region
    _
  $region21: #{cifar10_ae_cls_forward.5} parent=0 // pred_fallthru
    _

// kernel: cifar10_ae_cls_forward.6
$region0: #{cifar10_ae_cls_forward.6}
  #allocation0 [shape = 'u32[]', space=smem, size = 0x4, offset = 0x4, fixed_abs, tag = 'smem constant byte address 0x4 - core index']
  #allocation1 [shape = 'u32[72,128]{1,0:T(1,128)}', space=vmem, size = 0x9000, scoped, tag = 'internal scratch']
  %s0 = inlined_call_operand.vmem [shape: bf16[32,384], index: 0, kind: input, shape index: {}]
  %s1 = inlined_call_operand.vmem [shape: bf16[384,128], index: 1, kind: input, shape index: {}]
  %s2 = inlined_call_operand.vmem [shape: f32[1,128], index: 2, kind: input, shape index: {}]
  %s3 = inlined_call_operand.vmem [shape: bf16[32,128], index: 3, kind: output, shape index: {}]
  %s4 = sld [smem:[#allocation0]]
  $region22: #{cifar10_ae_cls_forward.6} parent=0
    _
  %s6 = ssub.s32 1, %s4
  %s7 = scalar_select 0, %s6, %s4
  // Predicated region
  $region2: #{cifar10_ae_cls_forward.6} parent=0 // pred_check
    _
  $region3: #{cifar10_ae_cls_forward.6} parent=0 // pred_check_branch
    %9 = sbr.rel (0) target = $region5
  $region4: #{cifar10_ae_cls_forward.6} parent=0 // pred_region
    _
  $region5: #{cifar10_ae_cls_forward.6} parent=0 // pred_fallthru
    _
  // Predicated region
  $region6: #{cifar10_ae_cls_forward.6} parent=0 // pred_check
    _
  $region7: #{cifar10_ae_cls_forward.6} parent=0 // pred_check_branch
    %11 = sbr.rel (0) target = $region9
  $region8: #{cifar10_ae_cls_forward.6} parent=0 // pred_region
    _
  $region9: #{cifar10_ae_cls_forward.6} parent=0 // pred_fallthru
    _
  // Predicated region
  $region10: #{cifar10_ae_cls_forward.6} parent=0 // pred_check
    _
  $region11: #{cifar10_ae_cls_forward.6} parent=0 // pred_check_branch
    %13 = sbr.rel (0) target = $region13
  $region12: #{cifar10_ae_cls_forward.6} parent=0 // pred_region
    _
  $region13: #{cifar10_ae_cls_forward.6} parent=0 // pred_fallthru
    _
  %v14 = vld [vmem:[%s0] sm:$0xff]
  %v15 = vld [vmem:[%s0 + $0x8] sm:$0xf]
  %v16 = vld [vmem:[%s0 + $0xc] sm:$0xff]
  %v17 = vld [vmem:[%s0 + $0x14] sm:$0xf]
  %v18 = vld [vmem:[%s0 + $0x18] sm:$0xff]
  %v19 = vld [vmem:[%s0 + $0x20] sm:$0xf]
  %v20 = vld [vmem:[%s0 + $0x24] sm:$0xff]
  %v21 = vld [vmem:[%s0 + $0x2c] sm:$0xf]
  %v22 = vld [vmem:[%s1] sm:$0xf]
  %v23 = vld [vmem:[%s1 + $0x4] sm:$0xf]
  %v24 = vld [vmem:[%s1 + $0x8] sm:$0xf]
  %v25 = vld [vmem:[%s1 + $0xc] sm:$0xf]
  %v26 = vld [vmem:[%s1 + $0x10] sm:$0xf]
  %v27 = vld [vmem:[%s1 + $0x14] sm:$0xf]
  %v28 = vld [vmem:[%s1 + $0x18] sm:$0xf]
  %v29 = vld [vmem:[%s1 + $0x1c] sm:$0xf]
  %v30 = vld [vmem:[%s1 + $0x20] sm:$0xf]
  %v31 = vld [vmem:[%s1 + $0x24] sm:$0xf]
  %v32 = vld [vmem:[%s1 + $0x28] sm:$0xf]
  %v33 = vld [vmem:[%s1 + $0x2c] sm:$0xf]
  %v34 = vld [vmem:[%s1 + $0x30] sm:$0xf]
  %v35 = vld [vmem:[%s1 + $0x34] sm:$0xf]
  %v36 = vld [vmem:[%s1 + $0x38] sm:$0xf]
  %v37 = vld [vmem:[%s1 + $0x3c] sm:$0xf]
  %v38 = vld [vmem:[%s1 + $0x40] sm:$0xf]
  %v39 = vld [vmem:[%s1 + $0x44] sm:$0xf]
  %v40 = vld [vmem:[%s1 + $0x48] sm:$0xf]
  %v41 = vld [vmem:[%s1 + $0x4c] sm:$0xf]
  %v42 = vld [vmem:[%s1 + $0x50] sm:$0xf]
  %v43 = vld [vmem:[%s1 + $0x54] sm:$0xf]
  %v44 = vld [vmem:[%s1 + $0x58] sm:$0xf]
  %v45 = vld [vmem:[%s1 + $0x5c] sm:$0xf]
  %v46 = vld [vmem:[%s1 + $0x60] sm:$0xf]
  %v47 = vld [vmem:[%s1 + $0x64] sm:$0xf]
  %v48 = vld [vmem:[%s1 + $0x68] sm:$0xf]
  %v49 = vld [vmem:[%s1 + $0x6c] sm:$0xf]
  %v50 = vld [vmem:[%s1 + $0x70] sm:$0xf]
  %v51 = vld [vmem:[%s1 + $0x74] sm:$0xf]
  %v52 = vld [vmem:[%s1 + $0x78] sm:$0xf]
  %v53 = vld [vmem:[%s1 + $0x7c] sm:$0xf]
  %v54 = vld [vmem:[%s1 + $0x80] sm:$0xf]
  %v55 = vld [vmem:[%s1 + $0x84] sm:$0xf]
  %v56 = vld [vmem:[%s1 + $0x88] sm:$0xf]
  %v57 = vld [vmem:[%s1 + $0x8c] sm:$0xf]
  %v58 = vld [vmem:[%s1 + $0x90] sm:$0xf]
  %v59 = vld [vmem:[%s1 + $0x94] sm:$0xf]
  %v60 = vld [vmem:[%s1 + $0x98] sm:$0xf]
  %v61 = vld [vmem:[%s1 + $0x9c] sm:$0xf]
  %v62 = vld [vmem:[%s1 + $0xa0] sm:$0xf]
  %v63 = vld [vmem:[%s1 + $0xa4] sm:$0xf]
  %v64 = vld [vmem:[%s1 + $0xa8] sm:$0xf]
  %v65 = vld [vmem:[%s1 + $0xac] sm:$0xf]
  %v66 = vld [vmem:[%s1 + $0xb0] sm:$0xf]
  %v67 = vld [vmem:[%s1 + $0xb4] sm:$0xf]
  %v68 = vld [vmem:[%s1 + $0xb8] sm:$0xf]
  %v69 = vld [vmem:[%s1 + $0xbc] sm:$0xf]
  %v70 = vld [vmem:[%s2] sm:$0x1]
  %v72 = vperm.slane %v70, 0
  %v82 = vunpack.c.l.b16 %v14
  %v83 = vunpack.c.h.b16 %v14
  %v84 = vunpack.c.l.b16 %v15
  %v85 = vunpack.c.l.b16 %v16
  %v86 = vunpack.c.h.b16 %v16
  %v87 = vunpack.c.l.b16 %v17
  %v88 = vunpack.c.l.b16 %v18
  %v89 = vunpack.c.h.b16 %v18
  %v90 = vunpack.c.l.b16 %v19
  %v91 = vunpack.c.l.b16 %v20
  %v92 = vunpack.c.h.b16 %v20
  %v93 = vunpack.c.l.b16 %v21
  %v94 = vpack.c.b16 %v85, %v82
  %v95 = vpack.c.b16 %v86, %v83
  %v96 = vpack.c.b16 %v87, %v84
  %v97 = vpack.c.b16 %v91, %v88
  %v98 = vpack.c.b16 %v92, %v89
  %v99 = vpack.c.b16 %v93, %v90
  %v154 = vunpack.c.l.b16 %v22
  %v155 = vunpack.c.l.b16 %v23
  %v156 = vunpack.c.l.b16 %v24
  %v157 = vunpack.c.l.b16 %v25
  %v158 = vunpack.c.l.b16 %v26
  %v159 = vunpack.c.l.b16 %v27
  %v160 = vunpack.c.l.b16 %v28
  %v161 = vunpack.c.l.b16 %v29
  %v162 = vunpack.c.l.b16 %v30
  %v163 = vunpack.c.l.b16 %v31
  %v164 = vunpack.c.l.b16 %v32
  %v165 = vunpack.c.l.b16 %v33
  %v166 = vunpack.c.l.b16 %v34
  %v167 = vunpack.c.l.b16 %v35
  %v168 = vunpack.c.l.b16 %v36
  %v169 = vunpack.c.l.b16 %v37
  %v170 = vunpack.c.l.b16 %v38
  %v171 = vunpack.c.l.b16 %v39
  %v172 = vunpack.c.l.b16 %v40
  %v173 = vunpack.c.l.b16 %v41
  %v174 = vunpack.c.l.b16 %v42
  %v175 = vunpack.c.l.b16 %v43
  %v176 = vunpack.c.l.b16 %v44
  %v177 = vunpack.c.l.b16 %v45
  %v178 = vunpack.c.l.b16 %v46
  %v179 = vunpack.c.l.b16 %v47
  %v180 = vunpack.c.l.b16 %v48
  %v181 = vunpack.c.l.b16 %v49
  %v182 = vunpack.c.l.b16 %v50
  %v183 = vunpack.c.l.b16 %v51
  %v184 = vunpack.c.l.b16 %v52
  %v185 = vunpack.c.l.b16 %v53
  %v186 = vunpack.c.l.b16 %v54
  %v187 = vunpack.c.l.b16 %v55
  %v188 = vunpack.c.l.b16 %v56
  %v189 = vunpack.c.l.b16 %v57
  %v190 = vunpack.c.l.b16 %v58
  %v191 = vunpack.c.l.b16 %v59
  %v192 = vunpack.c.l.b16 %v60
  %v193 = vunpack.c.l.b16 %v61
  %v194 = vunpack.c.l.b16 %v62
  %v195 = vunpack.c.l.b16 %v63
  %v196 = vunpack.c.l.b16 %v64
  %v197 = vunpack.c.l.b16 %v65
  %v198 = vunpack.c.l.b16 %v66
  %v199 = vunpack.c.l.b16 %v67
  %v200 = vunpack.c.l.b16 %v68
  %v201 = vunpack.c.l.b16 %v69
  %v202 = vpack.c.b16 %v155, %v154
  %v203 = vpack.c.b16 %v157, %v156
  %v204 = vpack.c.b16 %v159, %v158
  %v205 = vpack.c.b16 %v161, %v160
  %v206 = vpack.c.b16 %v163, %v162
  %v207 = vpack.c.b16 %v165, %v164
  %v208 = vpack.c.b16 %v167, %v166
  %v209 = vpack.c.b16 %v169, %v168
  %v210 = vpack.c.b16 %v171, %v170
  %v211 = vpack.c.b16 %v173, %v172
  %v212 = vpack.c.b16 %v175, %v174
  %v213 = vpack.c.b16 %v177, %v176
  %v214 = vpack.c.b16 %v179, %v178
  %v215 = vpack.c.b16 %v181, %v180
  %v216 = vpack.c.b16 %v183, %v182
  %v217 = vpack.c.b16 %v185, %v184
  %v218 = vpack.c.b16 %v187, %v186
  %v219 = vpack.c.b16 %v189, %v188
  %v220 = vpack.c.b16 %v191, %v190
  %v221 = vpack.c.b16 %v193, %v192
  %v222 = vpack.c.b16 %v195, %v194
  %v223 = vpack.c.b16 %v197, %v196
  %v224 = vpack.c.b16 %v199, %v198
  %v225 = vpack.c.b16 %v201, %v200
  %250 = vmatpush.bf16.msra.mxu0 %v209
  %251 = vmatpush.bf16.msra.mxu0 %v208
  %252 = vmatpush.bf16.msra.mxu0 %v207
  %253 = vmatpush.bf16.msra.mxu0 %v206
  %254 = vmatpush.bf16.msra.mxu0 %v205
  %255 = vmatpush.bf16.msra.mxu0 %v204
  %256 = vmatpush.bf16.msra.mxu0 %v203
  %257 = vmatpush.bf16.msra.mxu0 %v202
  %258 = vmatmul.bf16.gmra.mxu0 %v94
  %v259 = vpop.f32.mrf.mxu0
  %v260 = vadd.f32 %v72, %v259
  %v261 = vpop.f32.mrf.mxu0
  %v262 = vadd.f32 %v72, %v261
  %263 = vmatmul.bf16.gmra.mxu0 %v97
  %v264 = vpop.f32.mrf.mxu0
  %v265 = vadd.f32 %v72, %v264
  %v266 = vpop.f32.mrf.mxu0
  %v267 = vadd.f32 %v72, %v266
  %268 = vdwg.mxu0
  %269 = vmatpush.bf16.msra.mxu0 %v217
  %270 = vmatpush.bf16.msra.mxu0 %v216
  %271 = vmatpush.bf16.msra.mxu0 %v215
  %272 = vmatpush.bf16.msra.mxu0 %v214
  %273 = vmatpush.bf16.msra.mxu0 %v213
  %274 = vmatpush.bf16.msra.mxu0 %v212
  %275 = vmatpush.bf16.msra.mxu0 %v211
  %276 = vmatpush.bf16.msra.mxu0 %v210
  %277 = vmatmul.bf16.gmra.mxu0 %v95
  %v278 = vpop.f32.mrf.mxu0
  %v279 = vadd.f32 %v260, %v278
  %v280 = vpop.f32.mrf.mxu0
  %v281 = vadd.f32 %v262, %v280
  %282 = vmatmul.bf16.gmra.mxu0 %v98
  %v283 = vpop.f32.mrf.mxu0
  %v284 = vadd.f32 %v265, %v283
  %v285 = vpop.f32.mrf.mxu0
  %v286 = vadd.f32 %v267, %v285
  %287 = vdwg.mxu0
  %288 = vmatpush.bf16.msra.mxu0 %v225
  %289 = vmatpush.bf16.msra.mxu0 %v224
  %290 = vmatpush.bf16.msra.mxu0 %v223
  %291 = vmatpush.bf16.msra.mxu0 %v222
  %292 = vmatpush.bf16.msra.mxu0 %v221
  %293 = vmatpush.bf16.msra.mxu0 %v220
  %294 = vmatpush.bf16.msra.mxu0 %v219
  %295 = vmatpush.bf16.msra.mxu0 %v218
  %296 = vmatmul.bf16.gmra.mxu0 %v96
  %v297 = vpop.f32.mrf.mxu0
  %v298 = vadd.f32 %v279, %v297
  %v299 = vpop.f32.mrf.mxu0
  %v300 = vadd.f32 %v281, %v299
  %301 = vmatmul.bf16.gmra.mxu0 %v99
  %v302 = vpop.f32.mrf.mxu0
  %v303 = vadd.f32 %v284, %v302
  %v304 = vpop.f32.mrf.mxu0
  %v305 = vadd.f32 %v286, %v304
  %306 = vdwg.mxu0
  %v307 = vmax.f32 %v298, 0.0
  %v308 = vmax.f32 %v300, 0.0
  %v309 = vmax.f32 %v303, 0.0
  %v310 = vmax.f32 %v305, 0.0
  %v311 = vpack.c.bf16 %v307, %v307
  %v312 = vpack.c.bf16 %v308, %v308
  %v313 = vpack.c.bf16 %v309, %v309
  %v314 = vpack.c.bf16 %v310, %v310
  %315 = vst [vmem:[%s3] sm:$0xf] %v311
  %316 = vst [vmem:[%s3 + $0x4] sm:$0xf] %v312
  %317 = vst [vmem:[%s3 + $0x8] sm:$0xf] %v313
  %318 = vst [vmem:[%s3 + $0xc] sm:$0xf] %v314
  // Predicated region
  $region14: #{cifar10_ae_cls_forward.6} parent=0 // pred_check
    _
  $region15: #{cifar10_ae_cls_forward.6} parent=0 // pred_check_branch
    %320 = sbr.rel (0) target = $region17
  $region16: #{cifar10_ae_cls_forward.6} parent=0 // pred_region
    _
  $region17: #{cifar10_ae_cls_forward.6} parent=0 // pred_fallthru
    _
  // Predicated region
  $region18: #{cifar10_ae_cls_forward.6} parent=0 // pred_check
    _
  $region19: #{cifar10_ae_cls_forward.6} parent=0 // pred_check_branch
    %322 = sbr.rel (0) target = $region21
  $region20: #{cifar10_ae_cls_forward.6} parent=0 // pred_region
    _
  $region21: #{cifar10_ae_cls_forward.6} parent=0 // pred_fallthru
    _

// kernel: cifar10_ae_cls_forward.7
$region0: #{cifar10_ae_cls_forward.7}
  #allocation0 [shape = 'u32[]', space=smem, size = 0x4, offset = 0x4, fixed_abs, tag = 'smem constant byte address 0x4 - core index']
  #allocation1 [shape = 'u32[72,128]{1,0:T(1,128)}', space=vmem, size = 0x9000, scoped, tag = 'internal scratch']
  #allocation2 [shape = 'f32[1,1]{1,0:T(1,128)S(1)}', space=vmem, size = 0x200, scoped, tag = 'scoped memory for cifar10_ae_cls_forward.7']
  %s0 = inlined_call_operand.vmem [shape: bf16[32,768], index: 0, kind: input, shape index: {}]
  %s1 = inlined_call_operand.vmem [shape: bf16[768,128], index: 1, kind: input, shape index: {}]
  %s2 = inlined_call_operand.vmem [shape: f32[1,128], index: 2, kind: input, shape index: {}]
  %s3 = inlined_call_operand.vmem [shape: f32[32,128], index: 3, kind: input, shape index: {}]
  %s4 = inlined_call_operand.vmem [shape: f32[8,32], index: 4, kind: input, shape index: {}]
  %s5 = inlined_call_operand.<no memory space> [shape: f32[1,1], index: 5, kind: input, shape index: {}]
  %s6 = inlined_call_operand.vmem [shape: f32[8,1], index: 6, kind: output, shape index: {}]
  %s7 = sld [smem:[#allocation0]]
  $region34: #{cifar10_ae_cls_forward.7} parent=0
    _
  %s9 = ssub.s32 1, %s7
  %s10 = scalar_select 0, %s9, %s7
  %v11 = vstv %s5
  %12 = vst [vmem:[#allocation2] sm:$0x1] %v11
  // Predicated region
  $region2: #{cifar10_ae_cls_forward.7} parent=0 // pred_check
    _
  $region3: #{cifar10_ae_cls_forward.7} parent=0 // pred_check_branch
    %14 = sbr.rel (0) target = $region5
  $region4: #{cifar10_ae_cls_forward.7} parent=0 // pred_region
    _
  $region5: #{cifar10_ae_cls_forward.7} parent=0 // pred_fallthru
    _
  // Predicated region
  $region6: #{cifar10_ae_cls_forward.7} parent=0 // pred_check
    _
  $region7: #{cifar10_ae_cls_forward.7} parent=0 // pred_check_branch
    %16 = sbr.rel (0) target = $region9
  $region8: #{cifar10_ae_cls_forward.7} parent=0 // pred_region
    _
  $region9: #{cifar10_ae_cls_forward.7} parent=0 // pred_fallthru
    _
  // Predicated region
  $region10: #{cifar10_ae_cls_forward.7} parent=0 // pred_check
    _
  $region11: #{cifar10_ae_cls_forward.7} parent=0 // pred_check_branch
    %18 = sbr.rel (0) target = $region13
  $region12: #{cifar10_ae_cls_forward.7} parent=0 // pred_region
    _
  $region13: #{cifar10_ae_cls_forward.7} parent=0 // pred_fallthru
    _
  // Predicated region
  $region14: #{cifar10_ae_cls_forward.7} parent=0 // pred_check
    _
  $region15: #{cifar10_ae_cls_forward.7} parent=0 // pred_check_branch
    %20 = sbr.rel (0) target = $region17
  $region16: #{cifar10_ae_cls_forward.7} parent=0 // pred_region
    _
  $region17: #{cifar10_ae_cls_forward.7} parent=0 // pred_fallthru
    _
  // Predicated region
  $region18: #{cifar10_ae_cls_forward.7} parent=0 // pred_check
    _
  $region19: #{cifar10_ae_cls_forward.7} parent=0 // pred_check_branch
    %22 = sbr.rel (0) target = $region21
  $region20: #{cifar10_ae_cls_forward.7} parent=0 // pred_region
    _
  $region21: #{cifar10_ae_cls_forward.7} parent=0 // pred_fallthru
    _
  // Predicated region
  $region22: #{cifar10_ae_cls_forward.7} parent=0 // pred_check
    _
  $region23: #{cifar10_ae_cls_forward.7} parent=0 // pred_check_branch
    %24 = sbr.rel (0) target = $region25
  $region24: #{cifar10_ae_cls_forward.7} parent=0 // pred_region
    _
  $region25: #{cifar10_ae_cls_forward.7} parent=0 // pred_fallthru
    _
  %v25 = vld [vmem:[%s0] sm:$0xff]
  %v26 = vld [vmem:[%s0 + $0x8] sm:$0xff]
  %v27 = vld [vmem:[%s0 + $0x10] sm:$0xff]
  %v28 = vld [vmem:[%s0 + $0x18] sm:$0xff]
  %v29 = vld [vmem:[%s0 + $0x20] sm:$0xff]
  %v30 = vld [vmem:[%s0 + $0x28] sm:$0xff]
  %v31 = vld [vmem:[%s0 + $0x30] sm:$0xff]
  %v32 = vld [vmem:[%s0 + $0x38] sm:$0xff]
  %v33 = vld [vmem:[%s0 + $0x40] sm:$0xff]
  %v34 = vld [vmem:[%s0 + $0x48] sm:$0xff]
  %v35 = vld [vmem:[%s0 + $0x50] sm:$0xff]
  %v36 = vld [vmem:[%s0 + $0x58] sm:$0xff]
  %v37 = vld [vmem:[%s1] sm:$0xf]
  %v38 = vld [vmem:[%s1 + $0x4] sm:$0xf]
  %v39 = vld [vmem:[%s1 + $0x8] sm:$0xf]
  %v40 = vld [vmem:[%s1 + $0xc] sm:$0xf]
  %v41 = vld [vmem:[%s1 + $0x10] sm:$0xf]
  %v42 = vld [vmem:[%s1 + $0x14] sm:$0xf]
  %v43 = vld [vmem:[%s1 + $0x18] sm:$0xf]
  %v44 = vld [vmem:[%s1 + $0x1c] sm:$0xf]
  %v45 = vld [vmem:[%s1 + $0x20] sm:$0xf]
  %v46 = vld [vmem:[%s1 + $0x24] sm:$0xf]
  %v47 = vld [vmem:[%s1 + $0x28] sm:$0xf]
  %v48 = vld [vmem:[%s1 + $0x2c] sm:$0xf]
  %v49 = vld [vmem:[%s1 + $0x30] sm:$0xf]
  %v50 = vld [vmem:[%s1 + $0x34] sm:$0xf]
  %v51 = vld [vmem:[%s1 + $0x38] sm:$0xf]
  %v52 = vld [vmem:[%s1 + $0x3c] sm:$0xf]
  %v53 = vld [vmem:[%s1 + $0x40] sm:$0xf]
  %v54 = vld [vmem:[%s1 + $0x44] sm:$0xf]
  %v55 = vld [vmem:[%s1 + $0x48] sm:$0xf]
  %v56 = vld [vmem:[%s1 + $0x4c] sm:$0xf]
  %v57 = vld [vmem:[%s1 + $0x50] sm:$0xf]
  %v58 = vld [vmem:[%s1 + $0x54] sm:$0xf]
  %v59 = vld [vmem:[%s1 + $0x58] sm:$0xf]
  %v60 = vld [vmem:[%s1 + $0x5c] sm:$0xf]
  %v61 = vld [vmem:[%s1 + $0x60] sm:$0xf]
  %v62 = vld [vmem:[%s1 + $0x64] sm:$0xf]
  %v63 = vld [vmem:[%s1 + $0x68] sm:$0xf]
  %v64 = vld [vmem:[%s1 + $0x6c] sm:$0xf]
  %v65 = vld [vmem:[%s1 + $0x70] sm:$0xf]
  %v66 = vld [vmem:[%s1 + $0x74] sm:$0xf]
  %v67 = vld [vmem:[%s1 + $0x78] sm:$0xf]
  %v68 = vld [vmem:[%s1 + $0x7c] sm:$0xf]
  %v69 = vld [vmem:[%s1 + $0x80] sm:$0xf]
  %v70 = vld [vmem:[%s1 + $0x84] sm:$0xf]
  %v71 = vld [vmem:[%s1 + $0x88] sm:$0xf]
  %v72 = vld [vmem:[%s1 + $0x8c] sm:$0xf]
  %v73 = vld [vmem:[%s1 + $0x90] sm:$0xf]
  %v74 = vld [vmem:[%s1 + $0x94] sm:$0xf]
  %v75 = vld [vmem:[%s1 + $0x98] sm:$0xf]
  %v76 = vld [vmem:[%s1 + $0x9c] sm:$0xf]
  %v77 = vld [vmem:[%s1 + $0xa0] sm:$0xf]
  %v78 = vld [vmem:[%s1 + $0xa4] sm:$0xf]
  %v79 = vld [vmem:[%s1 + $0xa8] sm:$0xf]
  %v80 = vld [vmem:[%s1 + $0xac] sm:$0xf]
  %v81 = vld [vmem:[%s1 + $0xb0] sm:$0xf]
  %v82 = vld [vmem:[%s1 + $0xb4] sm:$0xf]
  %v83 = vld [vmem:[%s1 + $0xb8] sm:$0xf]
  %v84 = vld [vmem:[%s1 + $0xbc] sm:$0xf]
  %v85 = vld [vmem:[%s1 + $0xc0] sm:$0xf]
  %v86 = vld [vmem:[%s1 + $0xc4] sm:$0xf]
  %v87 = vld [vmem:[%s1 + $0xc8] sm:$0xf]
  %v88 = vld [vmem:[%s1 + $0xcc] sm:$0xf]
  %v89 = vld [vmem:[%s1 + $0xd0] sm:$0xf]
  %v90 = vld [vmem:[%s1 + $0xd4] sm:$0xf]
  %v91 = vld [vmem:[%s1 + $0xd8] sm:$0xf]
  %v92 = vld [vmem:[%s1 + $0xdc] sm:$0xf]
  %v93 = vld [vmem:[%s1 + $0xe0] sm:$0xf]
  %v94 = vld [vmem:[%s1 + $0xe4] sm:$0xf]
  %v95 = vld [vmem:[%s1 + $0xe8] sm:$0xf]
  %v96 = vld [vmem:[%s1 + $0xec] sm:$0xf]
  %v97 = vld [vmem:[%s1 + $0xf0] sm:$0xf]
  %v98 = vld [vmem:[%s1 + $0xf4] sm:$0xf]
  %v99 = vld [vmem:[%s1 + $0xf8] sm:$0xf]
  %v100 = vld [vmem:[%s1 + $0xfc] sm:$0xf]
  %v101 = vld [vmem:[%s1 + $0x100] sm:$0xf]
  %v102 = vld [vmem:[%s1 + $0x104] sm:$0xf]
  %v103 = vld [vmem:[%s1 + $0x108] sm:$0xf]
  %v104 = vld [vmem:[%s1 + $0x10c] sm:$0xf]
  %v105 = vld [vmem:[%s1 + $0x110] sm:$0xf]
  %v106 = vld [vmem:[%s1 + $0x114] sm:$0xf]
  %v107 = vld [vmem:[%s1 + $0x118] sm:$0xf]
  %v108 = vld [vmem:[%s1 + $0x11c] sm:$0xf]
  %v109 = vld [vmem:[%s1 + $0x120] sm:$0xf]
  %v110 = vld [vmem:[%s1 + $0x124] sm:$0xf]
  %v111 = vld [vmem:[%s1 + $0x128] sm:$0xf]
  %v112 = vld [vmem:[%s1 + $0x12c] sm:$0xf]
  %v113 = vld [vmem:[%s1 + $0x130] sm:$0xf]
  %v114 = vld [vmem:[%s1 + $0x134] sm:$0xf]
  %v115 = vld [vmem:[%s1 + $0x138] sm:$0xf]
  %v116 = vld [vmem:[%s1 + $0x13c] sm:$0xf]
  %v117 = vld [vmem:[%s1 + $0x140] sm:$0xf]
  %v118 = vld [vmem:[%s1 + $0x144] sm:$0xf]
  %v119 = vld [vmem:[%s1 + $0x148] sm:$0xf]
  %v120 = vld [vmem:[%s1 + $0x14c] sm:$0xf]
  %v121 = vld [vmem:[%s1 + $0x150] sm:$0xf]
  %v122 = vld [vmem:[%s1 + $0x154] sm:$0xf]
  %v123 = vld [vmem:[%s1 + $0x158] sm:$0xf]
  %v124 = vld [vmem:[%s1 + $0x15c] sm:$0xf]
  %v125 = vld [vmem:[%s1 + $0x160] sm:$0xf]
  %v126 = vld [vmem:[%s1 + $0x164] sm:$0xf]
  %v127 = vld [vmem:[%s1 + $0x168] sm:$0xf]
  %v128 = vld [vmem:[%s1 + $0x16c] sm:$0xf]
  %v129 = vld [vmem:[%s1 + $0x170] sm:$0xf]
  %v130 = vld [vmem:[%s1 + $0x174] sm:$0xf]
  %v131 = vld [vmem:[%s1 + $0x178] sm:$0xf]
  %v132 = vld [vmem:[%s1 + $0x17c] sm:$0xf]
  %v133 = vld [vmem:[%s2] sm:$0x1]
  %v135 = vperm.slane %v133, 0
  %v149 = vunpack.c.l.b16 %v25
  %v150 = vunpack.c.h.b16 %v25
  %v151 = vunpack.c.l.b16 %v26
  %v152 = vunpack.c.h.b16 %v26
  %v153 = vunpack.c.l.b16 %v27
  %v154 = vunpack.c.h.b16 %v27
  %v155 = vunpack.c.l.b16 %v28
  %v156 = vunpack.c.h.b16 %v28
  %v157 = vunpack.c.l.b16 %v29
  %v158 = vunpack.c.h.b16 %v29
  %v159 = vunpack.c.l.b16 %v30
  %v160 = vunpack.c.h.b16 %v30
  %v161 = vunpack.c.l.b16 %v31
  %v162 = vunpack.c.h.b16 %v31
  %v163 = vunpack.c.l.b16 %v32
  %v164 = vunpack.c.h.b16 %v32
  %v165 = vunpack.c.l.b16 %v33
  %v166 = vunpack.c.h.b16 %v33
  %v167 = vunpack.c.l.b16 %v34
  %v168 = vunpack.c.h.b16 %v34
  %v169 = vunpack.c.l.b16 %v35
  %v170 = vunpack.c.h.b16 %v35
  %v171 = vunpack.c.l.b16 %v36
  %v172 = vunpack.c.h.b16 %v36
  %v173 = vpack.c.b16 %v155, %v149
  %v174 = vpack.c.b16 %v156, %v150
  %v175 = vpack.c.b16 %v157, %v151
  %v176 = vpack.c.b16 %v158, %v152
  %v177 = vpack.c.b16 %v159, %v153
  %v178 = vpack.c.b16 %v160, %v154
  %v179 = vpack.c.b16 %v167, %v161
  %v180 = vpack.c.b16 %v168, %v162
  %v181 = vpack.c.b16 %v169, %v163
  %v182 = vpack.c.b16 %v170, %v164
  %v183 = vpack.c.b16 %v171, %v165
  %v184 = vpack.c.b16 %v172, %v166
  %v293 = vunpack.c.l.b16 %v37
  %v294 = vunpack.c.l.b16 %v38
  %v295 = vunpack.c.l.b16 %v39
  %v296 = vunpack.c.l.b16 %v40
  %v297 = vunpack.c.l.b16 %v41
  %v298 = vunpack.c.l.b16 %v42
  %v299 = vunpack.c.l.b16 %v43
  %v300 = vunpack.c.l.b16 %v44
  %v301 = vunpack.c.l.b16 %v45
  %v302 = vunpack.c.l.b16 %v46
  %v303 = vunpack.c.l.b16 %v47
  %v304 = vunpack.c.l.b16 %v48
  %v305 = vunpack.c.l.b16 %v49
  %v306 = vunpack.c.l.b16 %v50
  %v307 = vunpack.c.l.b16 %v51
  %v308 = vunpack.c.l.b16 %v52
  %v309 = vunpack.c.l.b16 %v53
  %v310 = vunpack.c.l.b16 %v54
  %v311 = vunpack.c.l.b16 %v55
  %v312 = vunpack.c.l.b16 %v56
  %v313 = vunpack.c.l.b16 %v57
  %v314 = vunpack.c.l.b16 %v58
  %v315 = vunpack.c.l.b16 %v59
  %v316 = vunpack.c.l.b16 %v60
  %v317 = vunpack.c.l.b16 %v61
  %v318 = vunpack.c.l.b16 %v62
  %v319 = vunpack.c.l.b16 %v63
  %v320 = vunpack.c.l.b16 %v64
  %v321 = vunpack.c.l.b16 %v65
  %v322 = vunpack.c.l.b16 %v66
  %v323 = vunpack.c.l.b16 %v67
  %v324 = vunpack.c.l.b16 %v68
  %v325 = vunpack.c.l.b16 %v69
  %v326 = vunpack.c.l.b16 %v70
  %v327 = vunpack.c.l.b16 %v71
  %v328 = vunpack.c.l.b16 %v72
  %v329 = vunpack.c.l.b16 %v73
  %v330 = vunpack.c.l.b16 %v74
  %v331 = vunpack.c.l.b16 %v75
  %v332 = vunpack.c.l.b16 %v76
  %v333 = vunpack.c.l.b16 %v77
  %v334 = vunpack.c.l.b16 %v78
  %v335 = vunpack.c.l.b16 %v79
  %v336 = vunpack.c.l.b16 %v80
  %v337 = vunpack.c.l.b16 %v81
  %v338 = vunpack.c.l.b16 %v82
  %v339 = vunpack.c.l.b16 %v83
  %v340 = vunpack.c.l.b16 %v84
  %v341 = vunpack.c.l.b16 %v85
  %v342 = vunpack.c.l.b16 %v86
  %v343 = vunpack.c.l.b16 %v87
  %v344 = vunpack.c.l.b16 %v88
  %v345 = vunpack.c.l.b16 %v89
  %v346 = vunpack.c.l.b16 %v90
  %v347 = vunpack.c.l.b16 %v91
  %v348 = vunpack.c.l.b16 %v92
  %v349 = vunpack.c.l.b16 %v93
  %v350 = vunpack.c.l.b16 %v94
  %v351 = vunpack.c.l.b16 %v95
  %v352 = vunpack.c.l.b16 %v96
  %v353 = vunpack.c.l.b16 %v97
  %v354 = vunpack.c.l.b16 %v98
  %v355 = vunpack.c.l.b16 %v99
  %v356 = vunpack.c.l.b16 %v100
  %v357 = vunpack.c.l.b16 %v101
  %v358 = vunpack.c.l.b16 %v102
  %v359 = vunpack.c.l.b16 %v103
  %v360 = vunpack.c.l.b16 %v104
  %v361 = vunpack.c.l.b16 %v105
  %v362 = vunpack.c.l.b16 %v106
  %v363 = vunpack.c.l.b16 %v107
  %v364 = vunpack.c.l.b16 %v108
  %v365 = vunpack.c.l.b16 %v109
  %v366 = vunpack.c.l.b16 %v110
  %v367 = vunpack.c.l.b16 %v111
  %v368 = vunpack.c.l.b16 %v112
  %v369 = vunpack.c.l.b16 %v113
  %v370 = vunpack.c.l.b16 %v114
  %v371 = vunpack.c.l.b16 %v115
  %v372 = vunpack.c.l.b16 %v116
  %v373 = vunpack.c.l.b16 %v117
  %v374 = vunpack.c.l.b16 %v118
  %v375 = vunpack.c.l.b16 %v119
  %v376 = vunpack.c.l.b16 %v120
  %v377 = vunpack.c.l.b16 %v121
  %v378 = vunpack.c.l.b16 %v122
  %v379 = vunpack.c.l.b16 %v123
  %v380 = vunpack.c.l.b16 %v124
  %v381 = vunpack.c.l.b16 %v125
  %v382 = vunpack.c.l.b16 %v126
  %v383 = vunpack.c.l.b16 %v127
  %v384 = vunpack.c.l.b16 %v128
  %v385 = vunpack.c.l.b16 %v129
  %v386 = vunpack.c.l.b16 %v130
  %v387 = vunpack.c.l.b16 %v131
  %v388 = vunpack.c.l.b16 %v132
  %v389 = vpack.c.b16 %v294, %v293
  %v390 = vpack.c.b16 %v296, %v295
  %v391 = vpack.c.b16 %v298, %v297
  %v392 = vpack.c.b16 %v300, %v299
  %v393 = vpack.c.b16 %v302, %v301
  %v394 = vpack.c.b16 %v304, %v303
  %v395 = vpack.c.b16 %v306, %v305
  %v396 = vpack.c.b16 %v308, %v307
  %v397 = vpack.c.b16 %v310, %v309
  %v398 = vpack.c.b16 %v312, %v311
  %v399 = vpack.c.b16 %v314, %v313
  %v400 = vpack.c.b16 %v316, %v315
  %v401 = vpack.c.b16 %v318, %v317
  %v402 = vpack.c.b16 %v320, %v319
  %v403 = vpack.c.b16 %v322, %v321
  %v404 = vpack.c.b16 %v324, %v323
  %v405 = vpack.c.b16 %v326, %v325
  %v406 = vpack.c.b16 %v328, %v327
  %v407 = vpack.c.b16 %v330, %v329
  %v408 = vpack.c.b16 %v332, %v331
  %v409 = vpack.c.b16 %v334, %v333
  %v410 = vpack.c.b16 %v336, %v335
  %v411 = vpack.c.b16 %v338, %v337
  %v412 = vpack.c.b16 %v340, %v339
  %v413 = vpack.c.b16 %v342, %v341
  %v414 = vpack.c.b16 %v344, %v343
  %v415 = vpack.c.b16 %v346, %v345
  %v416 = vpack.c.b16 %v348, %v347
  %v417 = vpack.c.b16 %v350, %v349
  %v418 = vpack.c.b16 %v352, %v351
  %v419 = vpack.c.b16 %v354, %v353
  %v420 = vpack.c.b16 %v356, %v355
  %v421 = vpack.c.b16 %v358, %v357
  %v422 = vpack.c.b16 %v360, %v359
  %v423 = vpack.c.b16 %v362, %v361
  %v424 = vpack.c.b16 %v364, %v363
  %v425 = vpack.c.b16 %v366, %v365
  %v426 = vpack.c.b16 %v368, %v367
  %v427 = vpack.c.b16 %v370, %v369
  %v428 = vpack.c.b16 %v372, %v371
  %v429 = vpack.c.b16 %v374, %v373
  %v430 = vpack.c.b16 %v376, %v375
  %v431 = vpack.c.b16 %v378, %v377
  %v432 = vpack.c.b16 %v380, %v379
  %v433 = vpack.c.b16 %v382, %v381
  %v434 = vpack.c.b16 %v384, %v383
  %v435 = vpack.c.b16 %v386, %v385
  %v436 = vpack.c.b16 %v388, %v387
  %485 = vmatpush.bf16.msra.mxu0 %v396
  %486 = vmatpush.bf16.msra.mxu0 %v395
  %487 = vmatpush.bf16.msra.mxu0 %v394
  %488 = vmatpush.bf16.msra.mxu0 %v393
  %489 = vmatpush.bf16.msra.mxu0 %v392
  %490 = vmatpush.bf16.msra.mxu0 %v391
  %491 = vmatpush.bf16.msra.mxu0 %v390
  %492 = vmatpush.bf16.msra.mxu0 %v389
  %493 = vmatmul.bf16.gmra.mxu0 %v173
  %v494 = vpop.f32.mrf.mxu0
  %v495 = vadd.f32 %v135, %v494
  %v496 = vpop.f32.mrf.mxu0
  %v497 = vadd.f32 %v135, %v496
  %498 = vmatmul.bf16.gmra.mxu0 %v179
  %v499 = vpop.f32.mrf.mxu0
  %v500 = vadd.f32 %v135, %v499
  %v501 = vpop.f32.mrf.mxu0
  %v502 = vadd.f32 %v135, %v501
  %503 = vdwg.mxu0
  %504 = vmatpush.bf16.msra.mxu0 %v404
  %505 = vmatpush.bf16.msra.mxu0 %v403
  %506 = vmatpush.bf16.msra.mxu0 %v402
  %507 = vmatpush.bf16.msra.mxu0 %v401
  %508 = vmatpush.bf16.msra.mxu0 %v400
  %509 = vmatpush.bf16.msra.mxu0 %v399
  %510 = vmatpush.bf16.msra.mxu0 %v398
  %511 = vmatpush.bf16.msra.mxu0 %v397
  %512 = vmatmul.bf16.gmra.mxu0 %v174
  %v513 = vpop.f32.mrf.mxu0
  %v514 = vadd.f32 %v495, %v513
  %v515 = vpop.f32.mrf.mxu0
  %v516 = vadd.f32 %v497, %v515
  %517 = vmatmul.bf16.gmra.mxu0 %v180
  %v518 = vpop.f32.mrf.mxu0
  %v519 = vadd.f32 %v500, %v518
  %v520 = vpop.f32.mrf.mxu0
  %v521 = vadd.f32 %v502, %v520
  %522 = vdwg.mxu0
  %523 = vmatpush.bf16.msra.mxu0 %v412
  %524 = vmatpush.bf16.msra.mxu0 %v411
  %525 = vmatpush.bf16.msra.mxu0 %v410
  %526 = vmatpush.bf16.msra.mxu0 %v409
  %527 = vmatpush.bf16.msra.mxu0 %v408
  %528 = vmatpush.bf16.msra.mxu0 %v407
  %529 = vmatpush.bf16.msra.mxu0 %v406
  %530 = vmatpush.bf16.msra.mxu0 %v405
  %531 = vmatmul.bf16.gmra.mxu0 %v175
  %v532 = vpop.f32.mrf.mxu0
  %v533 = vadd.f32 %v514, %v532
  %v534 = vpop.f32.mrf.mxu0
  %v535 = vadd.f32 %v516, %v534
  %536 = vmatmul.bf16.gmra.mxu0 %v181
  %v537 = vpop.f32.mrf.mxu0
  %v538 = vadd.f32 %v519, %v537
  %v539 = vpop.f32.mrf.mxu0
  %v540 = vadd.f32 %v521, %v539
  %541 = vdwg.mxu0
  %542 = vmatpush.bf16.msra.mxu0 %v420
  %543 = vmatpush.bf16.msra.mxu0 %v419
  %544 = vmatpush.bf16.msra.mxu0 %v418
  %545 = vmatpush.bf16.msra.mxu0 %v417
  %546 = vmatpush.bf16.msra.mxu0 %v416
  %547 = vmatpush.bf16.msra.mxu0 %v415
  %548 = vmatpush.bf16.msra.mxu0 %v414
  %549 = vmatpush.bf16.msra.mxu0 %v413
  %550 = vmatmul.bf16.gmra.mxu0 %v176
  %v551 = vpop.f32.mrf.mxu0
  %v552 = vadd.f32 %v533, %v551
  %v553 = vpop.f32.mrf.mxu0
  %v554 = vadd.f32 %v535, %v553
  %555 = vmatmul.bf16.gmra.mxu0 %v182
  %v556 = vpop.f32.mrf.mxu0
  %v557 = vadd.f32 %v538, %v556
  %v558 = vpop.f32.mrf.mxu0
  %v559 = vadd.f32 %v540, %v558
  %560 = vdwg.mxu0
  %561 = vmatpush.bf16.msra.mxu0 %v428
  %562 = vmatpush.bf16.msra.mxu0 %v427
  %563 = vmatpush.bf16.msra.mxu0 %v426
  %564 = vmatpush.bf16.msra.mxu0 %v425
  %565 = vmatpush.bf16.msra.mxu0 %v424
  %566 = vmatpush.bf16.msra.mxu0 %v423
  %567 = vmatpush.bf16.msra.mxu0 %v422
  %568 = vmatpush.bf16.msra.mxu0 %v421
  %569 = vmatmul.bf16.gmra.mxu0 %v177
  %v570 = vpop.f32.mrf.mxu0
  %v571 = vadd.f32 %v552, %v570
  %v572 = vpop.f32.mrf.mxu0
  %v573 = vadd.f32 %v554, %v572
  %574 = vmatmul.bf16.gmra.mxu0 %v183
  %v575 = vpop.f32.mrf.mxu0
  %v576 = vadd.f32 %v557, %v575
  %v577 = vpop.f32.mrf.mxu0
  %v578 = vadd.f32 %v559, %v577
  %579 = vdwg.mxu0
  %580 = vmatpush.bf16.msra.mxu0 %v436
  %581 = vmatpush.bf16.msra.mxu0 %v435
  %582 = vmatpush.bf16.msra.mxu0 %v434
  %583 = vmatpush.bf16.msra.mxu0 %v433
  %584 = vmatpush.bf16.msra.mxu0 %v432
  %585 = vmatpush.bf16.msra.mxu0 %v431
  %586 = vmatpush.bf16.msra.mxu0 %v430
  %587 = vmatpush.bf16.msra.mxu0 %v429
  %588 = vmatmul.bf16.gmra.mxu0 %v178
  %v589 = vpop.f32.mrf.mxu0
  %v590 = vadd.f32 %v571, %v589
  %v591 = vpop.f32.mrf.mxu0
  %v592 = vadd.f32 %v573, %v591
  %593 = vmatmul.bf16.gmra.mxu0 %v184
  %v594 = vpop.f32.mrf.mxu0
  %v595 = vadd.f32 %v576, %v594
  %v596 = vpop.f32.mrf.mxu0
  %v597 = vadd.f32 %v578, %v596
  %598 = vdwg.mxu0
  %v599 = vmax.f32 %v590, 0.0
  %v600 = vmax.f32 %v592, 0.0
  %v601 = vmax.f32 %v595, 0.0
  %v602 = vmax.f32 %v597, 0.0
  %v603 = vld [vmem:[%s3] sm:$0xff]
  %v604 = vld [vmem:[%s3 + $0x8] sm:$0xff]
  %v605 = vld [vmem:[%s3 + $0x10] sm:$0xff]
  %v606 = vld [vmem:[%s3 + $0x18] sm:$0xff]
  %v607 = vmul.f32 %v599, %v603
  %v608 = vmul.f32 %v600, %v604
  %v609 = vmul.f32 %v601, %v605
  %v610 = vmul.f32 %v602, %v606
  %v611 = vld [vmem:[%s4] sm:$0xff]
  %vm612 = vcmask 261120
  %v614 = vsel %vm612, %v611, 0
  %616 = vmatpush.msra.mxu0 0.0
  %617 = vmatpush.msra.mxu0 0.0
  %618 = vmatpush.msra.mxu0 0.0
  %619 = vmatpush.msra.mxu0 0.0
  %620 = vmatpush.msra.mxu0 0.0
  %621 = vmatpush.msra.mxu0 0.0
  %622 = vmatpush.msra.mxu0 0.0
  %623 = vmatpush.msra.mxu0 0.0
  %624 = vmatpush.msra.mxu0 0.0
  %625 = vmatpush.msra.mxu0 0.0
  %626 = vmatpush.msra.mxu0 0.0
  %627 = vmatpush.msra.mxu0 0.0
  %628 = vmatpush.msra.mxu0 %v610
  %629 = vmatpush.msra.mxu0 %v609
  %630 = vmatpush.msra.mxu0 %v608
  %631 = vmatpush.msra.mxu0 %v607
  %632 = vmatmul.f32.gmra.mxu0 %v614
  %v633 = vpop.f32.mrf.mxu0
  %v634 = vadd.f32 0.0, %v633
  %635 = vdwg.mxu0
  %636 = vadd.xlane.f32.xlu0 %v634
  %v637 = vpop.xlane.xlu0 %636
  %v638 = vld [vmem:[#allocation2] sm:$0x1]
  %v640 = vperm.slane %v638, 0
  %v642 = vadd.f32 %v637, %v640
  %v643 = vsub.f32 0.0, %v642
  %v644 = vmul.f32 %v643, 1.442695
  %v645 = vpow.pop %v644
  %v646 = vadd.f32 %v645, 1.0
  %v647 = vrcp.pop %v646
  %vm648 = vcmask 7168
  %649 = vst.msk [vmem:[%s6] sm:$0xff] %vm648, %v647
  // Predicated region
  $region26: #{cifar10_ae_cls_forward.7} parent=0 // pred_check
    _
  $region27: #{cifar10_ae_cls_forward.7} parent=0 // pred_check_branch
    %651 = sbr.rel (0) target = $region29
  $region28: #{cifar10_ae_cls_forward.7} parent=0 // pred_region
    _
  $region29: #{cifar10_ae_cls_forward.7} parent=0 // pred_fallthru
    _
  // Predicated region
  $region30: #{cifar10_ae_cls_forward.7} parent=0 // pred_check
    _
  $region31: #{cifar10_ae_cls_forward.7} parent=0 // pred_check_branch
    %653 = sbr.rel (0) target = $region33
  $region32: #{cifar10_ae_cls_forward.7} parent=0 // pred_region
    _
  $region33: #{cifar10_ae_cls_forward.7} parent=0 // pred_fallthru
    _

</llo_original>
